<compile_context>
chip_gen: v7x
topology: tpu7x:2x2x1
jax: 0.10.0
libtpu: 0.0.40
codegen_flags: <defaults>
</compile_context>

<pallas_src>
import functools

import jax
import jax.numpy as jnp
from jax import lax
from jax.experimental import pallas as pl
from jax.experimental.pallas import tpu as pltpu

L = 32          # seq_len
DIM = 4         # model dim
NUM_HEADS = 2
HEAD_DIM = DIM // NUM_HEADS
KSIZE = 3       # conv kernel size
EPS = 1e-5
SCALE = HEAD_DIM ** (-0.5)
NEG_BIG = -1e30


def _attn_layer_kernel(x_ref, g_ref, b_ref, wqkv_ref, wo_ref, cw_ref, cb_ref,
                       y_ref, attn_ref, *, seq_len, num_heads, head_dim):
    x = x_ref[...]                                    # (N, D); N = (batch chunk) * L folded in sublanes
    n, d = x.shape
    hn = num_heads * n
    pow2_seq = (seq_len & (seq_len - 1)) == 0
    pow2_n = (n & (n - 1)) == 0

    # ---- LayerNorm over channels (biased variance, eps inside sqrt) ----
    mu = jnp.mean(x, axis=-1, keepdims=True)
    xc = x - mu
    var = jnp.mean(xc * xc, axis=-1, keepdims=True)
    xn = xc * lax.rsqrt(var + EPS) * g_ref[...] + b_ref[...]

    # ---- fused q|k|v projection: one MXU push (k-scale pre-folded into the weight) ----
    qkv = jnp.dot(xn, wqkv_ref[...], preferred_element_type=jnp.float32)      # (N, 3D)

    # ---- fused depthwise conv (kernel=3, pad=1) on the whole qkv slab.
    #      Sequence shifts via XLU sublane rolls (positive shifts only) + boundary zeroing. ----
    row = lax.broadcasted_iota(jnp.int32, (n, 1), 0)                          # flat row index in block
    rt = (row & (seq_len - 1)) if pow2_seq else (row % seq_len)               # position within sequence
    prev = jnp.where(rt == 0, 0.0, pltpu.roll(qkv, shift=1, axis=0))          # qkv[t-1] (0 at seq start)
    nxt = jnp.where(rt == seq_len - 1, 0.0,
                    pltpu.roll(qkv, shift=n - 1, axis=0))                     # qkv[t+1] (0 at seq end)
    qkv = prev * cw_ref[0:1, :] + qkv * cw_ref[1:2, :] + nxt * cw_ref[2:3, :] + cb_ref[...]

    q = qkv[:, 0:d]
    k = qkv[:, d:2 * d]
    v = qkv[:, 2 * d:3 * d]

    # ---- per-head channel masks (tiny (1, D) iota, built once) ----
    lane = lax.broadcasted_iota(jnp.int32, (1, d), 1)
    hmask = [((lane >= h_ * head_dim) & (lane < (h_ + 1) * head_dim)).astype(jnp.float32)
             for h_ in range(num_heads)]

    # ---- both heads fused: head-masked k / v stacked along sublanes -> (H*N, D) ----
    k2 = jnp.concatenate([k * hm for hm in hmask], axis=0)
    v2 = jnp.concatenate([v * hm for hm in hmask], axis=0)

    # sim laid out lane-dense: (N, H*N), head h_ occupies lanes [h_*N, (h_+1)*N).
    sim = lax.dot_general(q, k2, (((1,), (1,)), ((), ())),
                          preferred_element_type=jnp.float32)                 # (N, H*N)

    # ---- block-causal mask bias, built once from (N,1)/(1,H*N) iotas ----
    col = lax.broadcasted_iota(jnp.int32, (1, hn), 1)
    cj = (col & (n - 1)) if pow2_n else (col % n)                             # key index within block
    banned = (cj > row) | (cj < row - rt)                                     # causal + no cross-sequence
    sim = sim + jnp.where(banned, NEG_BIG, 0.0)

    # ---- per-head (segmented) softmax on the fused slab ----
    segs = [(col >= h_ * n) & (col < (h_ + 1) * n) for h_ in range(num_heads)]  # (1, H*N) lane masks
    m_b = jnp.zeros_like(sim)
    for sm in segs:
        m_h = jnp.max(jnp.where(sm, sim, NEG_BIG), axis=-1, keepdims=True)
        m_b = jnp.where(sm, m_h, m_b)
    p = jnp.exp(sim - m_b)                                                    # banned entries -> exactly 0
    inv_b = jnp.zeros_like(sim)
    for sm in segs:
        s_h = jnp.sum(jnp.where(sm, p, 0.0), axis=-1, keepdims=True)
        r_h = pl.reciprocal(s_h, approx=True)                                 # EUP slot
        r_h = r_h * (2.0 - s_h * r_h)                                         # one Newton step -> f32 accuracy
        inv_b = jnp.where(sm, r_h, inv_b)
    attn = p * inv_b                                                          # (N, H*N)

    # ---- context for both heads with a single MXU push: (N, H*N) @ (H*N, D) ----
    ctxt = jnp.dot(attn, v2, preferred_element_type=jnp.float32)              # (N, D)
    out = jnp.dot(ctxt, wo_ref[...], preferred_element_type=jnp.float32)

    y_ref[...] = x + out                               # residual with the ORIGINAL (pre-norm) x
    attn_ref[...] = attn                               # single lane-dense store for both heads


def _default_num_batch_blocks(batch):
    """2 grid steps on v7x (2 TensorCores/chip); 1 fat step on single-TC v5e/v6e."""
    try:
        kind = jax.devices()[0].device_kind.lower()
    except Exception:
        return 1
    if "v7" in kind and batch % 2 == 0:
        return 2
    return 1


def attention_layer_pallas(x, params, *, num_batch_blocks=None):
    """x: (B, L, D) float32. Returns (y, attn) with y (B, L, D), attn (B, H, L, L)."""
    B, seq, dim = x.shape
    H, hd = NUM_HEADS, HEAD_DIM
    if num_batch_blocks is None:
        num_batch_blocks = _default_num_batch_blocks(B)
    assert B % num_batch_blocks == 0
    bb = B // num_batch_blocks
    N = bb * seq                                       # rows per grid step (batch folded into sublanes)
    HN = H * N                                         # lane width of the attention slab

    # Fuse projection weights (k-scale folded into wk) and the three depthwise convs.
    wqkv_t = jnp.concatenate([params["wq_t"], params["wk_t"] * SCALE, params["wv_t"]], axis=1)  # (D, 3D)
    cw = jnp.concatenate([params["cq_w"], params["ck_w"], params["cv_w"]], axis=1)              # (K, 3D)
    cb = jnp.concatenate([params["cq_b"], params["ck_b"], params["cv_b"]], axis=1)              # (1, 3D)

    x2d = x.reshape(B * seq, dim)

    kernel = functools.partial(_attn_layer_kernel, seq_len=seq, num_heads=H, head_dim=hd)

    const2d = lambda i: (0, 0)
    in_specs = [
        pl.BlockSpec((N, dim), lambda i: (i, 0)),          # x (batch folded into sublanes)
        pl.BlockSpec((1, dim), const2d),                   # ln gamma
        pl.BlockSpec((1, dim), const2d),                   # ln beta
        pl.BlockSpec((dim, 3 * dim), const2d),             # fused wqkv^T (k-scale folded)
        pl.BlockSpec((dim, dim), const2d),                 # wo^T
        pl.BlockSpec((KSIZE, 3 * dim), const2d),           # fused conv weight (tap, channel)
        pl.BlockSpec((1, 3 * dim), const2d),               # fused conv bias
    ]
    out_specs = (
        pl.BlockSpec((N, dim), lambda i: (i, 0)),          # y (flat tokens)
        pl.BlockSpec((N, HN), lambda i: (i, 0)),           # lane-dense attn slab (heads along lanes)
    )
    out_shape = (jax.ShapeDtypeStruct((B * seq, dim), jnp.float32),
                 jax.ShapeDtypeStruct((B * seq, HN), jnp.float32))

    y2d, attn_flat = pl.pallas_call(
        kernel,
        out_shape=out_shape,
        grid=(num_batch_blocks,),
        in_specs=in_specs,
        out_specs=out_specs,
        compiler_params=pltpu.CompilerParams(dimension_semantics=("parallel",)),
    )(x2d, params["ln_g"], params["ln_b"], wqkv_t, params["wo_t"], cw, cb)

    y = y2d.reshape(B, seq, dim)

    # Extract per-sequence (L, L) diagonal blocks with one vectorized gather.
    # attn_flat[blk*N + b*L + tq, h*N + b*L + tk] == attn[blk*bb + b, h, tq, tk]
    a6 = attn_flat.reshape(num_batch_blocks, bb, seq, H, bb, seq)
    idx = jnp.arange(bb)
    diag = a6[:, idx, :, :, idx, :]                        # (bb, nb, L, H, L)  (adv-index dims move front)
    attn = diag.transpose(1, 0, 3, 2, 4).reshape(B, H, seq, seq)
    return y, attn


def attention_layer_ref(x, params):
    """Pure-JAX reference mirroring the PyTorch forward pass."""
    B, seq, dim = x.shape
    H, h = NUM_HEADS, HEAD_DIM

    mu = x.mean(-1, keepdims=True)
    var = ((x - mu) ** 2).mean(-1, keepdims=True)
    xn = (x - mu) / jnp.sqrt(var + EPS) * params["ln_g"][0] + params["ln_b"][0]

    q = xn @ params["wq_t"]
    k = (xn @ params["wk_t"]) * SCALE
    v = xn @ params["wv_t"]

    def conv(z, w, b):  # z (B,L,D), w (K,D), b (1,D)
        zp = jnp.pad(z, ((0, 0), (1, 1), (0, 0)))
        return zp[:, :-2] * w[0] + zp[:, 1:-1] * w[1] + zp[:, 2:] * w[2] + b[0]

    q = conv(q, params["cq_w"], params["cq_b"])
    k = conv(k, params["ck_w"], params["ck_b"])
    v = conv(v, params["cv_w"], params["cv_b"])

    qh = q.reshape(B, seq, H, h).transpose(0, 2, 1, 3)
    kh = k.reshape(B, seq, H, h).transpose(0, 2, 1, 3)
    vh = v.reshape(B, seq, H, h).transpose(0, 2, 1, 3)

    sim = jnp.einsum("bhqd,bhkd->bhqk", qh, kh)
    mask = jnp.triu(jnp.ones((seq, seq), bool), k=1)[None, None]
    sim = jnp.where(mask, -jnp.inf, sim)
    attn = jax.nn.softmax(sim, axis=-1)
    ctxt = jnp.einsum("bhqk,bhkd->bhqd", attn, vh)
    out = ctxt.transpose(0, 2, 1, 3).reshape(B, seq, dim) @ params["wo_t"]
    return x + out, attn


def make_params(key):
    ks = jax.random.split(key, 10)

    def w(k, shape, s=0.3):
        return jax.random.normal(k, shape, jnp.float32) * s

    return {
        "ln_g": jnp.ones((1, DIM), jnp.float32),
        "ln_b": jnp.zeros((1, DIM), jnp.float32),
        "wq_t": w(ks[0], (DIM, DIM)),
        "wk_t": w(ks[1], (DIM, DIM)),
        "wv_t": w(ks[2], (DIM, DIM)),
        "wo_t": w(ks[3], (DIM, DIM)),
        "cq_w": w(ks[4], (KSIZE, DIM)),
        "cq_b": w(ks[5], (1, DIM), 0.1),
        "ck_w": w(ks[6], (KSIZE, DIM)),
        "ck_b": w(ks[7], (1, DIM), 0.1),
        "cv_w": w(ks[8], (KSIZE, DIM)),
        "cv_b": w(ks[9], (1, DIM), 0.1),
    }


if __name__ == "__main__":
    key = jax.random.PRNGKey(0)
    kx, kp = jax.random.split(key)
    B = 2
    x = jax.random.normal(kx, (B, L, DIM), jnp.float32)
    params = make_params(kp)

    y, attn = attention_layer_pallas(x, params)
    y = jax.block_until_ready(y)
    attn = jax.block_until_ready(attn)

    y_ref, attn_ref = attention_layer_ref(x, params)
    assert jnp.allclose(y, y_ref, atol=1e-4, rtol=1e-4), "output mismatch"
    assert jnp.allclose(attn, attn_ref, atol=1e-4, rtol=1e-4), "attn mismatch"

    print("KERNEL_OK")
</pallas_src>

<mosaic_0001>
module attributes {stable_mosaic.version = 11 : i64} {
  func.func @_attn_layer_kernel(%arg0: i32, %arg1: memref<64x4xf32, #tpu.memory_space<vmem>>, %arg2: memref<1x4xf32, #tpu.memory_space<vmem>>, %arg3: memref<1x4xf32, #tpu.memory_space<vmem>>, %arg4: memref<4x12xf32, #tpu.memory_space<vmem>>, %arg5: memref<4x4xf32, #tpu.memory_space<vmem>>, %arg6: memref<3x12xf32, #tpu.memory_space<vmem>>, %arg7: memref<1x12xf32, #tpu.memory_space<vmem>>, %arg8: memref<64x4xf32, #tpu.memory_space<vmem>>, %arg9: memref<64x128xf32, #tpu.memory_space<vmem>>) attributes {dimension_semantics = [#tpu.dimension_semantics<parallel>], iteration_bounds = array<i64: 1>, scalar_prefetch = 0 : i64, scratch_operands = 0 : i64, tpu.core_type = #tpu.core_type<tc>, window_params = [{transform_indices = @transform_0, window_bounds = array<i64: 64, 4>}, {pipeline_mode = #tpu.pipeline_mode<synchronous>, transform_indices = @transform_1, window_bounds = array<i64: 1, 4>}, {pipeline_mode = #tpu.pipeline_mode<synchronous>, transform_indices = @transform_2, window_bounds = array<i64: 1, 4>}, {pipeline_mode = #tpu.pipeline_mode<synchronous>, transform_indices = @transform_3, window_bounds = array<i64: 4, 12>}, {pipeline_mode = #tpu.pipeline_mode<synchronous>, transform_indices = @transform_4, window_bounds = array<i64: 4, 4>}, {pipeline_mode = #tpu.pipeline_mode<synchronous>, transform_indices = @transform_5, window_bounds = array<i64: 3, 12>}, {pipeline_mode = #tpu.pipeline_mode<synchronous>, transform_indices = @transform_6, window_bounds = array<i64: 1, 12>}, {transform_indices = @transform_7, window_bounds = array<i64: 64, 4>}, {transform_indices = @transform_8, window_bounds = array<i64: 64, 128>}]} {
    %c0 = arith.constant 0 : index
    %c0_0 = arith.constant 0 : index
    %0 = vector.load %arg1[%c0, %c0_0] : memref<64x4xf32, #tpu.memory_space<vmem>>, vector<64x4xf32>
    %cst = arith.constant dense<0.000000e+00> : vector<64xf32>
    %1 = vector.multi_reduction <add>, %0, %cst [1] : vector<64x4xf32> to vector<64xf32>
    %2 = vector.shape_cast %1 : vector<64xf32> to vector<64x1xf32>
    %cst_1 = arith.constant 4.000000e+00 : f32
    %3 = vector.broadcast %cst_1 : f32 to vector<64x1xf32>
    %4 = arith.divf %2, %3 : vector<64x1xf32>
    %5 = vector.broadcast %4 : vector<64x1xf32> to vector<64x4xf32>
    %6 = arith.subf %0, %5 : vector<64x4xf32>
    %7 = arith.mulf %6, %6 : vector<64x4xf32>
    %cst_2 = arith.constant dense<0.000000e+00> : vector<64xf32>
    %8 = vector.multi_reduction <add>, %7, %cst_2 [1] : vector<64x4xf32> to vector<64xf32>
    %9 = vector.shape_cast %8 : vector<64xf32> to vector<64x1xf32>
    %cst_3 = arith.constant 4.000000e+00 : f32
    %10 = vector.broadcast %cst_3 : f32 to vector<64x1xf32>
    %11 = arith.divf %9, %10 : vector<64x1xf32>
    %cst_4 = arith.constant 9.99999974E-6 : f32
    %12 = vector.broadcast %cst_4 : f32 to vector<64x1xf32>
    %13 = arith.addf %11, %12 : vector<64x1xf32>
    %14 = math.rsqrt %13 : vector<64x1xf32>
    %15 = vector.broadcast %14 : vector<64x1xf32> to vector<64x4xf32>
    %16 = arith.mulf %6, %15 : vector<64x4xf32>
    %c0_5 = arith.constant 0 : index
    %c0_6 = arith.constant 0 : index
    %17 = vector.load %arg2[%c0_5, %c0_6] : memref<1x4xf32, #tpu.memory_space<vmem>>, vector<1x4xf32>
    %18 = vector.broadcast %17 : vector<1x4xf32> to vector<64x4xf32>
    %19 = arith.mulf %16, %18 : vector<64x4xf32>
    %c0_7 = arith.constant 0 : index
    %c0_8 = arith.constant 0 : index
    %20 = vector.load %arg3[%c0_7, %c0_8] : memref<1x4xf32, #tpu.memory_space<vmem>>, vector<1x4xf32>
    %21 = vector.broadcast %20 : vector<1x4xf32> to vector<64x4xf32>
    %22 = arith.addf %19, %21 : vector<64x4xf32>
    %c0_9 = arith.constant 0 : index
    %c0_10 = arith.constant 0 : index
    %23 = vector.load %arg4[%c0_9, %c0_10] : memref<4x12xf32, #tpu.memory_space<vmem>>, vector<4x12xf32>
    %cst_11 = arith.constant dense<0.000000e+00> : vector<64x12xf32>
    %24 = tpu.matmul %22, %23, %cst_11 {dimension_numbers = #tpu.dot_dimension_numbers<[1], [0], [0], [1], [0, 0, 1, 1], [], []>} : vector<64x4xf32>, vector<4x12xf32>, vector<64x12xf32> -> vector<64x12xf32>
    %25 = tpu.iota {dimensions = array<i32: 0>} : vector<64x1xi32>
    %c31_i32 = arith.constant 31 : i32
    %26 = vector.broadcast %c31_i32 : i32 to vector<64x1xi32>
    %27 = arith.andi %25, %26 : vector<64x1xi32>
    %c0_i32 = arith.constant 0 : i32
    %28 = vector.broadcast %c0_i32 : i32 to vector<64x1xi32>
    %29 = arith.cmpi eq, %27, %28 : vector<64x1xi32>
    %c1_i32 = arith.constant 1 : i32
    %30 = tpu.dynamic_rotate %24 by %c1_i32 dim 0 : vector<64x12xf32>, i32 -> vector<64x12xf32>
    %cst_12 = arith.constant 0.000000e+00 : f32
    %31 = vector.shape_cast %29 : vector<64x1xi1> to vector<64x1xi1>
    %32 = vector.broadcast %31 : vector<64x1xi1> to vector<64x12xi1>
    %33 = vector.broadcast %cst_12 : f32 to vector<64x12xf32>
    %34 = arith.select %32, %33, %30 : vector<64x12xi1>, vector<64x12xf32>
    %c31_i32_13 = arith.constant 31 : i32
    %35 = vector.broadcast %c31_i32_13 : i32 to vector<64x1xi32>
    %36 = arith.cmpi eq, %27, %35 : vector<64x1xi32>
    %c63_i32 = arith.constant 63 : i32
    %37 = tpu.dynamic_rotate %24 by %c63_i32 dim 0 : vector<64x12xf32>, i32 -> vector<64x12xf32>
    %cst_14 = arith.constant 0.000000e+00 : f32
    %38 = vector.shape_cast %36 : vector<64x1xi1> to vector<64x1xi1>
    %39 = vector.broadcast %38 : vector<64x1xi1> to vector<64x12xi1>
    %40 = vector.broadcast %cst_14 : f32 to vector<64x12xf32>
    %41 = arith.select %39, %40, %37 : vector<64x12xi1>, vector<64x12xf32>
    %c0_15 = arith.constant 0 : index
    %c0_16 = arith.constant 0 : index
    %42 = vector.load %arg6[%c0_15, %c0_16] : memref<3x12xf32, #tpu.memory_space<vmem>>, vector<1x12xf32>
    %43 = vector.broadcast %42 : vector<1x12xf32> to vector<64x12xf32>
    %44 = arith.mulf %34, %43 : vector<64x12xf32>
    %c1 = arith.constant 1 : index
    %c0_17 = arith.constant 0 : index
    %45 = vector.load %arg6[%c1, %c0_17] : memref<3x12xf32, #tpu.memory_space<vmem>>, vector<1x12xf32>
    %46 = vector.broadcast %45 : vector<1x12xf32> to vector<64x12xf32>
    %47 = arith.mulf %24, %46 : vector<64x12xf32>
    %48 = arith.addf %44, %47 : vector<64x12xf32>
    %c2 = arith.constant 2 : index
    %c0_18 = arith.constant 0 : index
    %49 = vector.load %arg6[%c2, %c0_18] : memref<3x12xf32, #tpu.memory_space<vmem>>, vector<1x12xf32>
    %50 = vector.broadcast %49 : vector<1x12xf32> to vector<64x12xf32>
    %51 = arith.mulf %41, %50 : vector<64x12xf32>
    %52 = arith.addf %48, %51 : vector<64x12xf32>
    %c0_19 = arith.constant 0 : index
    %c0_20 = arith.constant 0 : index
    %53 = vector.load %arg7[%c0_19, %c0_20] : memref<1x12xf32, #tpu.memory_space<vmem>>, vector<1x12xf32>
    %54 = vector.broadcast %53 : vector<1x12xf32> to vector<64x12xf32>
    %55 = arith.addf %52, %54 : vector<64x12xf32>
    %56 = vector.extract_strided_slice %55 {offsets = [0, 0], sizes = [64, 4], strides = [1, 1]} : vector<64x12xf32> to vector<64x4xf32>
    %57 = vector.extract_strided_slice %55 {offsets = [0, 4], sizes = [64, 4], strides = [1, 1]} : vector<64x12xf32> to vector<64x4xf32>
    %58 = vector.extract_strided_slice %55 {offsets = [0, 8], sizes = [64, 4], strides = [1, 1]} : vector<64x12xf32> to vector<64x4xf32>
    %59 = tpu.iota {dimensions = array<i32: 1>} : vector<1x4xi32>
    %c0_i32_21 = arith.constant 0 : i32
    %60 = vector.broadcast %c0_i32_21 : i32 to vector<1x4xi32>
    %61 = arith.cmpi sge, %59, %60 : vector<1x4xi32>
    %c2_i32 = arith.constant 2 : i32
    %62 = vector.broadcast %c2_i32 : i32 to vector<1x4xi32>
    %63 = arith.cmpi slt, %59, %62 : vector<1x4xi32>
    %64 = arith.andi %61, %63 : vector<1x4xi1>
    %65 = arith.extui %64 : vector<1x4xi1> to vector<1x4xi32>
    %66 = arith.sitofp %65 : vector<1x4xi32> to vector<1x4xf32>
    %c2_i32_22 = arith.constant 2 : i32
    %67 = vector.broadcast %c2_i32_22 : i32 to vector<1x4xi32>
    %68 = arith.cmpi sge, %59, %67 : vector<1x4xi32>
    %c4_i32 = arith.constant 4 : i32
    %69 = vector.broadcast %c4_i32 : i32 to vector<1x4xi32>
    %70 = arith.cmpi slt, %59, %69 : vector<1x4xi32>
    %71 = arith.andi %68, %70 : vector<1x4xi1>
    %72 = arith.extui %71 : vector<1x4xi1> to vector<1x4xi32>
    %73 = arith.sitofp %72 : vector<1x4xi32> to vector<1x4xf32>
    %74 = vector.broadcast %66 : vector<1x4xf32> to vector<64x4xf32>
    %75 = arith.mulf %57, %74 : vector<64x4xf32>
    %76 = vector.broadcast %73 : vector<1x4xf32> to vector<64x4xf32>
    %77 = arith.mulf %57, %76 : vector<64x4xf32>
    %78 = tpu.concatenate %75, %77 in 0 : vector<64x4xf32>, vector<64x4xf32> -> vector<128x4xf32>
    %79 = vector.broadcast %66 : vector<1x4xf32> to vector<64x4xf32>
    %80 = arith.mulf %58, %79 : vector<64x4xf32>
    %81 = vector.broadcast %73 : vector<1x4xf32> to vector<64x4xf32>
    %82 = arith.mulf %58, %81 : vector<64x4xf32>
    %83 = tpu.concatenate %80, %82 in 0 : vector<64x4xf32>, vector<64x4xf32> -> vector<128x4xf32>
    %cst_23 = arith.constant dense<0.000000e+00> : vector<64x128xf32>
    %84 = tpu.matmul %56, %78, %cst_23 {dimension_numbers = #tpu.dot_dimension_numbers<[1], [1], [0], [0], [0, 0, 1, 0], [], []>} : vector<64x4xf32>, vector<128x4xf32>, vector<64x128xf32> -> vector<64x128xf32>
    %85 = tpu.iota {dimensions = array<i32: 1>} : vector<1x128xi32>
    %c63_i32_24 = arith.constant 63 : i32
    %86 = vector.broadcast %c63_i32_24 : i32 to vector<1x128xi32>
    %87 = arith.andi %85, %86 : vector<1x128xi32>
    %88 = vector.broadcast %87 : vector<1x128xi32> to vector<64x128xi32>
    %89 = vector.broadcast %25 : vector<64x1xi32> to vector<64x128xi32>
    %90 = arith.cmpi sgt, %88, %89 : vector<64x128xi32>
    %91 = arith.subi %25, %27 : vector<64x1xi32>
    %92 = vector.broadcast %87 : vector<1x128xi32> to vector<64x128xi32>
    %93 = vector.broadcast %91 : vector<64x1xi32> to vector<64x128xi32>
    %94 = arith.cmpi slt, %92, %93 : vector<64x128xi32>
    %95 = arith.ori %90, %94 : vector<64x128xi1>
    %cst_25 = arith.constant -1.000000e+30 : f32
    %cst_26 = arith.constant 0.000000e+00 : f32
    %96 = vector.broadcast %cst_25 : f32 to vector<64x128xf32>
    %97 = vector.broadcast %cst_26 : f32 to vector<64x128xf32>
    %98 = arith.select %95, %96, %97 : vector<64x128xi1>, vector<64x128xf32>
    %99 = arith.addf %84, %98 : vector<64x128xf32>
    %c0_i32_27 = arith.constant 0 : i32
    %100 = vector.broadcast %c0_i32_27 : i32 to vector<1x128xi32>
    %101 = arith.cmpi sge, %85, %100 : vector<1x128xi32>
    %c64_i32 = arith.constant 64 : i32
    %102 = vector.broadcast %c64_i32 : i32 to vector<1x128xi32>
    %103 = arith.cmpi slt, %85, %102 : vector<1x128xi32>
    %104 = arith.andi %101, %103 : vector<1x128xi1>
    %c64_i32_28 = arith.constant 64 : i32
    %105 = vector.broadcast %c64_i32_28 : i32 to vector<1x128xi32>
    %106 = arith.cmpi sge, %85, %105 : vector<1x128xi32>
    %c128_i32 = arith.constant 128 : i32
    %107 = vector.broadcast %c128_i32 : i32 to vector<1x128xi32>
    %108 = arith.cmpi slt, %85, %107 : vector<1x128xi32>
    %109 = arith.andi %106, %108 : vector<1x128xi1>
    %cst_29 = arith.constant 0.000000e+00 : f32
    %110 = vector.broadcast %cst_29 : f32 to vector<64x128xf32>
    %cst_30 = arith.constant -1.000000e+30 : f32
    %111 = vector.shape_cast %104 : vector<1x128xi1> to vector<1x128xi1>
    %112 = vector.broadcast %111 : vector<1x128xi1> to vector<64x128xi1>
    %113 = vector.broadcast %cst_30 : f32 to vector<64x128xf32>
    %114 = arith.select %112, %99, %113 : vector<64x128xi1>, vector<64x128xf32>
    %cst_31 = arith.constant dense<0xFF800000> : vector<64xf32>
    %115 = vector.multi_reduction <maximumf>, %114, %cst_31 [1] : vector<64x128xf32> to vector<64xf32>
    %116 = vector.shape_cast %115 : vector<64xf32> to vector<64x1xf32>
    %117 = vector.shape_cast %104 : vector<1x128xi1> to vector<1x128xi1>
    %118 = vector.broadcast %117 : vector<1x128xi1> to vector<64x128xi1>
    %119 = vector.shape_cast %116 : vector<64x1xf32> to vector<64x1xf32>
    %120 = vector.broadcast %119 : vector<64x1xf32> to vector<64x128xf32>
    %121 = arith.select %118, %120, %110 : vector<64x128xi1>, vector<64x128xf32>
    %cst_32 = arith.constant -1.000000e+30 : f32
    %122 = vector.shape_cast %109 : vector<1x128xi1> to vector<1x128xi1>
    %123 = vector.broadcast %122 : vector<1x128xi1> to vector<64x128xi1>
    %124 = vector.broadcast %cst_32 : f32 to vector<64x128xf32>
    %125 = arith.select %123, %99, %124 : vector<64x128xi1>, vector<64x128xf32>
    %cst_33 = arith.constant dense<0xFF800000> : vector<64xf32>
    %126 = vector.multi_reduction <maximumf>, %125, %cst_33 [1] : vector<64x128xf32> to vector<64xf32>
    %127 = vector.shape_cast %126 : vector<64xf32> to vector<64x1xf32>
    %128 = vector.shape_cast %109 : vector<1x128xi1> to vector<1x128xi1>
    %129 = vector.broadcast %128 : vector<1x128xi1> to vector<64x128xi1>
    %130 = vector.shape_cast %127 : vector<64x1xf32> to vector<64x1xf32>
    %131 = vector.broadcast %130 : vector<64x1xf32> to vector<64x128xf32>
    %132 = arith.select %129, %131, %121 : vector<64x128xi1>, vector<64x128xf32>
    %133 = arith.subf %99, %132 : vector<64x128xf32>
    %134 = math.exp %133 : vector<64x128xf32>
    %cst_34 = arith.constant 0.000000e+00 : f32
    %135 = vector.broadcast %cst_34 : f32 to vector<64x128xf32>
    %cst_35 = arith.constant 0.000000e+00 : f32
    %136 = vector.shape_cast %104 : vector<1x128xi1> to vector<1x128xi1>
    %137 = vector.broadcast %136 : vector<1x128xi1> to vector<64x128xi1>
    %138 = vector.broadcast %cst_35 : f32 to vector<64x128xf32>
    %139 = arith.select %137, %134, %138 : vector<64x128xi1>, vector<64x128xf32>
    %cst_36 = arith.constant dense<0.000000e+00> : vector<64xf32>
    %140 = vector.multi_reduction <add>, %139, %cst_36 [1] : vector<64x128xf32> to vector<64xf32>
    %141 = vector.shape_cast %140 : vector<64xf32> to vector<64x1xf32>
    %142 = tpu.reciprocal %141 {approx = true} : vector<64x1xf32> -> vector<64x1xf32>
    %143 = arith.mulf %141, %142 : vector<64x1xf32>
    %cst_37 = arith.constant 2.000000e+00 : f32
    %144 = vector.broadcast %cst_37 : f32 to vector<64x1xf32>
    %145 = arith.subf %144, %143 : vector<64x1xf32>
    %146 = arith.mulf %142, %145 : vector<64x1xf32>
    %147 = vector.shape_cast %104 : vector<1x128xi1> to vector<1x128xi1>
    %148 = vector.broadcast %147 : vector<1x128xi1> to vector<64x128xi1>
    %149 = vector.shape_cast %146 : vector<64x1xf32> to vector<64x1xf32>
    %150 = vector.broadcast %149 : vector<64x1xf32> to vector<64x128xf32>
    %151 = arith.select %148, %150, %135 : vector<64x128xi1>, vector<64x128xf32>
    %cst_38 = arith.constant 0.000000e+00 : f32
    %152 = vector.shape_cast %109 : vector<1x128xi1> to vector<1x128xi1>
    %153 = vector.broadcast %152 : vector<1x128xi1> to vector<64x128xi1>
    %154 = vector.broadcast %cst_38 : f32 to vector<64x128xf32>
    %155 = arith.select %153, %134, %154 : vector<64x128xi1>, vector<64x128xf32>
    %cst_39 = arith.constant dense<0.000000e+00> : vector<64xf32>
    %156 = vector.multi_reduction <add>, %155, %cst_39 [1] : vector<64x128xf32> to vector<64xf32>
    %157 = vector.shape_cast %156 : vector<64xf32> to vector<64x1xf32>
    %158 = tpu.reciprocal %157 {approx = true} : vector<64x1xf32> -> vector<64x1xf32>
    %159 = arith.mulf %157, %158 : vector<64x1xf32>
    %cst_40 = arith.constant 2.000000e+00 : f32
    %160 = vector.broadcast %cst_40 : f32 to vector<64x1xf32>
    %161 = arith.subf %160, %159 : vector<64x1xf32>
    %162 = arith.mulf %158, %161 : vector<64x1xf32>
    %163 = vector.shape_cast %109 : vector<1x128xi1> to vector<1x128xi1>
    %164 = vector.broadcast %163 : vector<1x128xi1> to vector<64x128xi1>
    %165 = vector.shape_cast %162 : vector<64x1xf32> to vector<64x1xf32>
    %166 = vector.broadcast %165 : vector<64x1xf32> to vector<64x128xf32>
    %167 = arith.select %164, %166, %151 : vector<64x128xi1>, vector<64x128xf32>
    %168 = arith.mulf %134, %167 : vector<64x128xf32>
    %cst_41 = arith.constant dense<0.000000e+00> : vector<64x4xf32>
    %169 = tpu.matmul %168, %83, %cst_41 {dimension_numbers = #tpu.dot_dimension_numbers<[1], [0], [0], [1], [0, 0, 1, 1], [], []>} : vector<64x128xf32>, vector<128x4xf32>, vector<64x4xf32> -> vector<64x4xf32>
    %c0_42 = arith.constant 0 : index
    %c0_43 = arith.constant 0 : index
    %170 = vector.load %arg5[%c0_42, %c0_43] : memref<4x4xf32, #tpu.memory_space<vmem>>, vector<4x4xf32>
    %cst_44 = arith.constant dense<0.000000e+00> : vector<64x4xf32>
    %171 = tpu.matmul %169, %170, %cst_44 {dimension_numbers = #tpu.dot_dimension_numbers<[1], [0], [0], [1], [0, 0, 1, 1], [], []>} : vector<64x4xf32>, vector<4x4xf32>, vector<64x4xf32> -> vector<64x4xf32>
    %172 = arith.addf %0, %171 : vector<64x4xf32>
    %c0_45 = arith.constant 0 : index
    %c0_46 = arith.constant 0 : index
    %173 = vector.load %arg8[%c0_45, %c0_46] : memref<64x4xf32, #tpu.memory_space<vmem>>, vector<64x4xf32>
    tpu.vector_store %arg8[%c0_45, %c0_46], %172 {strides = array<i32>} : memref<64x4xf32, #tpu.memory_space<vmem>>, vector<64x4xf32>,
    %c0_47 = arith.constant 0 : index
    %c0_48 = arith.constant 0 : index
    %174 = vector.load %arg9[%c0_47, %c0_48] : memref<64x128xf32, #tpu.memory_space<vmem>>, vector<64x128xf32>
    tpu.vector_store %arg9[%c0_47, %c0_48], %168 {strides = array<i32>} : memref<64x128xf32, #tpu.memory_space<vmem>>, vector<64x128xf32>,
    return
  }
  func.func @transform_0(%arg0: i32) -> (i32, i32) {
    %c0_i32 = arith.constant 0 : i32
    %c0_i32_0 = arith.constant 0 : i32
    return %arg0, %c0_i32 : i32, i32
  }
  func.func @transform_1(%arg0: i32) -> (i32, i32) {
    %c0_i32 = arith.constant 0 : i32
    %c0_i32_0 = arith.constant 0 : i32
    %c0_i32_1 = arith.constant 0 : i32
    return %c0_i32, %c0_i32_0 : i32, i32
  }
  func.func @transform_2(%arg0: i32) -> (i32, i32) {
    %c0_i32 = arith.constant 0 : i32
    %c0_i32_0 = arith.constant 0 : i32
    %c0_i32_1 = arith.constant 0 : i32
    return %c0_i32, %c0_i32_0 : i32, i32
  }
  func.func @transform_3(%arg0: i32) -> (i32, i32) {
    %c0_i32 = arith.constant 0 : i32
    %c0_i32_0 = arith.constant 0 : i32
    %c0_i32_1 = arith.constant 0 : i32
    return %c0_i32, %c0_i32_0 : i32, i32
  }
  func.func @transform_4(%arg0: i32) -> (i32, i32) {
    %c0_i32 = arith.constant 0 : i32
    %c0_i32_0 = arith.constant 0 : i32
    %c0_i32_1 = arith.constant 0 : i32
    return %c0_i32, %c0_i32_0 : i32, i32
  }
  func.func @transform_5(%arg0: i32) -> (i32, i32) {
    %c0_i32 = arith.constant 0 : i32
    %c0_i32_0 = arith.constant 0 : i32
    %c0_i32_1 = arith.constant 0 : i32
    return %c0_i32, %c0_i32_0 : i32, i32
  }
  func.func @transform_6(%arg0: i32) -> (i32, i32) {
    %c0_i32 = arith.constant 0 : i32
    %c0_i32_0 = arith.constant 0 : i32
    %c0_i32_1 = arith.constant 0 : i32
    return %c0_i32, %c0_i32_0 : i32, i32
  }
  func.func @transform_7(%arg0: i32) -> (i32, i32) {
    %c0_i32 = arith.constant 0 : i32
    %c0_i32_0 = arith.constant 0 : i32
    return %arg0, %c0_i32 : i32, i32
  }
  func.func @transform_8(%arg0: i32) -> (i32, i32) {
    %c0_i32 = arith.constant 0 : i32
    %c0_i32_0 = arith.constant 0 : i32
    return %arg0, %c0_i32 : i32, i32
  }
}

</mosaic_0001>

<llo_original>
// kernel: tpu_custom_call.1
$region0: #{tpu_custom_call.1}
  #allocation0 [shape = 'u32[]', space=smem, size = 0x4, offset = 0x4, fixed_abs, tag = 'smem constant byte address 0x4 - core index']
  #allocation1 [shape = 'u32[144,128]{1,0:T(1,128)}', space=vmem, size = 0x12000, scoped, tag = 'internal scratch']
  %s0 = inlined_call_operand.vmem [shape: f32[64,4], index: 0, kind: input, shape index: {}]
  %s1 = inlined_call_operand.vmem [shape: f32[1,4], index: 1, kind: input, shape index: {}]
  %s2 = inlined_call_operand.vmem [shape: f32[1,4], index: 2, kind: input, shape index: {}]
  %s3 = inlined_call_operand.vmem [shape: f32[4,12], index: 3, kind: input, shape index: {}]
  %s4 = inlined_call_operand.vmem [shape: f32[4,4], index: 4, kind: input, shape index: {}]
  %s5 = inlined_call_operand.vmem [shape: f32[3,12], index: 5, kind: input, shape index: {}]
  %s6 = inlined_call_operand.vmem [shape: f32[1,12], index: 6, kind: input, shape index: {}]
  %s7 = inlined_call_operand.vmem [shape: f32[64,4], index: 7, kind: output, shape index: {0}]
  %s8 = inlined_call_operand.hbm [shape: f32[64,128], index: 8, kind: output, shape index: {1}]
  %9 = xla_tuple %s7, %s8
  %s10 = sld [smem:[#allocation0]]
  $region46: #{tpu_custom_call.1} parent=0
    _
  %s12 = ssub.s32 1, %s10
  %s13 = scalar_select 0, %s12, %s10
  $region1: #{tpu_custom_call.1} parent=0
    #allocation2 [shape = 'u8[32768]{0}', space=vmem, size = 0x8000, scoped, tag = 'output window, operand 1, single buffered']
    #allocation3 [shape = 's32[1]{0}', space=sflag, size = 0x4, scoped, tag = 'scoped memory for tpu_custom_call.1']
    %14 = vsyncpa [#allocation3], 0
    // Predicated region
    $region2: #{tpu_custom_call.1} parent=1 // pred_check
      _
    $region3: #{tpu_custom_call.1} parent=1 // pred_check_branch
      %16 = sbr.rel (0) target = $region5
    $region4: #{tpu_custom_call.1} parent=1 // pred_region
      _
    $region5: #{tpu_custom_call.1} parent=1 // pred_fallthru
      _
    // Predicated region
    $region6: #{tpu_custom_call.1} parent=1 // pred_check
      _
    $region7: #{tpu_custom_call.1} parent=1 // pred_check_branch
      %18 = sbr.rel (0) target = $region9
    $region8: #{tpu_custom_call.1} parent=1 // pred_region
      _
    $region9: #{tpu_custom_call.1} parent=1 // pred_fallthru
      _
    // Predicated region
    $region10: #{tpu_custom_call.1} parent=1 // pred_check
      _
    $region11: #{tpu_custom_call.1} parent=1 // pred_check_branch
      %20 = sbr.rel (0) target = $region13
    $region12: #{tpu_custom_call.1} parent=1 // pred_region
      _
    $region13: #{tpu_custom_call.1} parent=1 // pred_fallthru
      _
    // Predicated region
    $region14: #{tpu_custom_call.1} parent=1 // pred_check
      _
    $region15: #{tpu_custom_call.1} parent=1 // pred_check_branch
      %22 = sbr.rel (0) target = $region17
    $region16: #{tpu_custom_call.1} parent=1 // pred_region
      _
    $region17: #{tpu_custom_call.1} parent=1 // pred_fallthru
      _
    // Predicated region
    $region18: #{tpu_custom_call.1} parent=1 // pred_check
      _
    $region19: #{tpu_custom_call.1} parent=1 // pred_check_branch
      %24 = sbr.rel (0) target = $region21
    $region20: #{tpu_custom_call.1} parent=1 // pred_region
      _
    $region21: #{tpu_custom_call.1} parent=1 // pred_fallthru
      _
    // Predicated region
    $region22: #{tpu_custom_call.1} parent=1 // pred_check
      _
    $region23: #{tpu_custom_call.1} parent=1 // pred_check_branch
      %26 = sbr.rel (0) target = $region25
    $region24: #{tpu_custom_call.1} parent=1 // pred_region
      _
    $region25: #{tpu_custom_call.1} parent=1 // pred_fallthru
      _
    // Predicated region
    $region26: #{tpu_custom_call.1} parent=1 // pred_check
      _
    $region27: #{tpu_custom_call.1} parent=1 // pred_check_branch
      %28 = sbr.rel (0) target = $region29
    $region28: #{tpu_custom_call.1} parent=1 // pred_region
      _
    $region29: #{tpu_custom_call.1} parent=1 // pred_fallthru
      _
    %v29 = vld [vmem:[%s0] sm:$0xff]
    %v30 = vld [vmem:[%s0 + $0x8] sm:$0xff]
    %v31 = vld [vmem:[%s0 + $0x10] sm:$0xff]
    %v32 = vld [vmem:[%s0 + $0x18] sm:$0xff]
    %v33 = vld [vmem:[%s0 + $0x20] sm:$0xff]
    %v34 = vld [vmem:[%s0 + $0x28] sm:$0xff]
    %v35 = vld [vmem:[%s0 + $0x30] sm:$0xff]
    %v36 = vld [vmem:[%s0 + $0x38] sm:$0xff]
    %vm37 = vcmask 31744
    %v38 = vsel %vm37, %v29, 0.0
    %39 = vadd.xlane.f32.xlu0 %v38
    %v40 = vpop.xlane.xlu0 %39
    %v41 = vsel %vm37, %v30, 0.0
    %42 = vadd.xlane.f32.xlu0 %v41
    %v43 = vpop.xlane.xlu0 %42
    %v44 = vsel %vm37, %v31, 0.0
    %45 = vadd.xlane.f32.xlu0 %v44
    %v46 = vpop.xlane.xlu0 %45
    %v47 = vsel %vm37, %v32, 0.0
    %48 = vadd.xlane.f32.xlu0 %v47
    %v49 = vpop.xlane.xlu0 %48
    %v50 = vsel %vm37, %v33, 0.0
    %51 = vadd.xlane.f32.xlu0 %v50
    %v52 = vpop.xlane.xlu0 %51
    %v53 = vsel %vm37, %v34, 0.0
    %54 = vadd.xlane.f32.xlu0 %v53
    %v55 = vpop.xlane.xlu0 %54
    %v56 = vsel %vm37, %v35, 0.0
    %57 = vadd.xlane.f32.xlu0 %v56
    %v58 = vpop.xlane.xlu0 %57
    %v59 = vsel %vm37, %v36, 0.0
    %60 = vadd.xlane.f32.xlu0 %v59
    %v61 = vpop.xlane.xlu0 %60
    %v62 = vrcp.pop 4.0
    %v63 = vmul.f32 %v40, %v62
    %v64 = vmul.f32 %v43, %v62
    %v65 = vmul.f32 %v46, %v62
    %v66 = vmul.f32 %v49, %v62
    %v67 = vmul.f32 %v52, %v62
    %v68 = vmul.f32 %v55, %v62
    %v69 = vmul.f32 %v58, %v62
    %v70 = vmul.f32 %v61, %v62
    %v71 = vsub.f32 %v29, %v63
    %v72 = vsub.f32 %v30, %v64
    %v73 = vsub.f32 %v31, %v65
    %v74 = vsub.f32 %v32, %v66
    %v75 = vsub.f32 %v33, %v67
    %v76 = vsub.f32 %v34, %v68
    %v77 = vsub.f32 %v35, %v69
    %v78 = vsub.f32 %v36, %v70
    %v79 = vmul.f32 %v71, %v71
    %v80 = vmul.f32 %v72, %v72
    %v81 = vmul.f32 %v73, %v73
    %v82 = vmul.f32 %v74, %v74
    %v83 = vmul.f32 %v75, %v75
    %v84 = vmul.f32 %v76, %v76
    %v85 = vmul.f32 %v77, %v77
    %v86 = vmul.f32 %v78, %v78
    %v87 = vsel %vm37, %v79, 0.0
    %88 = vadd.xlane.f32.xlu0 %v87
    %v89 = vpop.xlane.xlu0 %88
    %v90 = vsel %vm37, %v80, 0.0
    %91 = vadd.xlane.f32.xlu0 %v90
    %v92 = vpop.xlane.xlu0 %91
    %v93 = vsel %vm37, %v81, 0.0
    %94 = vadd.xlane.f32.xlu0 %v93
    %v95 = vpop.xlane.xlu0 %94
    %v96 = vsel %vm37, %v82, 0.0
    %97 = vadd.xlane.f32.xlu0 %v96
    %v98 = vpop.xlane.xlu0 %97
    %v99 = vsel %vm37, %v83, 0.0
    %100 = vadd.xlane.f32.xlu0 %v99
    %v101 = vpop.xlane.xlu0 %100
    %v102 = vsel %vm37, %v84, 0.0
    %103 = vadd.xlane.f32.xlu0 %v102
    %v104 = vpop.xlane.xlu0 %103
    %v105 = vsel %vm37, %v85, 0.0
    %106 = vadd.xlane.f32.xlu0 %v105
    %v107 = vpop.xlane.xlu0 %106
    %v108 = vsel %vm37, %v86, 0.0
    %109 = vadd.xlane.f32.xlu0 %v108
    %v110 = vpop.xlane.xlu0 %109
    %v111 = vmul.f32 %v89, %v62
    %v112 = vmul.f32 %v92, %v62
    %v113 = vmul.f32 %v95, %v62
    %v114 = vmul.f32 %v98, %v62
    %v115 = vmul.f32 %v101, %v62
    %v116 = vmul.f32 %v104, %v62
    %v117 = vmul.f32 %v107, %v62
    %v118 = vmul.f32 %v110, %v62
    %v119 = vadd.f32 %v111, 1e-05
    %v120 = vadd.f32 %v112, 1e-05
    %v121 = vadd.f32 %v113, 1e-05
    %v122 = vadd.f32 %v114, 1e-05
    %v123 = vadd.f32 %v115, 1e-05
    %v124 = vadd.f32 %v116, 1e-05
    %v125 = vadd.f32 %v117, 1e-05
    %v126 = vadd.f32 %v118, 1e-05
    %v127 = vrsqrt.pop %v119
    %v128 = vrsqrt.pop %v120
    %v129 = vrsqrt.pop %v121
    %v130 = vrsqrt.pop %v122
    %v131 = vrsqrt.pop %v123
    %v132 = vrsqrt.pop %v124
    %v133 = vrsqrt.pop %v125
    %v134 = vrsqrt.pop %v126
    %v135 = vmul.f32 %v71, %v127
    %v136 = vmul.f32 %v72, %v128
    %v137 = vmul.f32 %v73, %v129
    %v138 = vmul.f32 %v74, %v130
    %v139 = vmul.f32 %v75, %v131
    %v140 = vmul.f32 %v76, %v132
    %v141 = vmul.f32 %v77, %v133
    %v142 = vmul.f32 %v78, %v134
    %v143 = vld [vmem:[%s1] sm:$0x1]
    %v145 = vlaneseq
    %v146 = vshrl.u32 %v145, 7
    %v147 = vsub.s32 0, %v146
    %v148 = vrot.slane %v143, %v147
    %v150 = vmul.f32 %v135, %v148
    %v151 = vmul.f32 %v136, %v148
    %v152 = vmul.f32 %v137, %v148
    %v153 = vmul.f32 %v138, %v148
    %v154 = vmul.f32 %v139, %v148
    %v155 = vmul.f32 %v140, %v148
    %v156 = vmul.f32 %v141, %v148
    %v157 = vmul.f32 %v142, %v148
    %v158 = vld [vmem:[%s2] sm:$0x1]
    %v160 = vlaneseq
    %v161 = vshrl.u32 %v160, 7
    %v162 = vsub.s32 0, %v161
    %v163 = vrot.slane %v158, %v162
    %v165 = vadd.f32 %v150, %v163
    %v166 = vadd.f32 %v151, %v163
    %v167 = vadd.f32 %v152, %v163
    %v168 = vadd.f32 %v153, %v163
    %v169 = vadd.f32 %v154, %v163
    %v170 = vadd.f32 %v155, %v163
    %v171 = vadd.f32 %v156, %v163
    %v172 = vadd.f32 %v157, %v163
    %v173 = vld [vmem:[%s3] sm:$0xf]
    %v175 = vsel %vm37, %v165, 0
    %v178 = vsel %vm37, %v166, 0
    %v181 = vsel %vm37, %v167, 0
    %v184 = vsel %vm37, %v168, 0
    %v187 = vsel %vm37, %v169, 0
    %v190 = vsel %vm37, %v170, 0
    %v193 = vsel %vm37, %v171, 0
    %v196 = vsel %vm37, %v172, 0
    %vm198 = vcmask 1043456
    %v200 = vsel %vm198, %v173, 0
    %202 = vmatprep.subr.mxu0 0.0
    %203 = vmatpush1.msra.mxu0 %v200
    %204 = vmatprep.subr.mxu0 0.0
    %205 = vmatpush1.msra.mxu0 0.0
    %206 = vmatprep.subr.mxu0 0.0
    %207 = vmatpush1.msra.mxu0 0.0
    %208 = vmatprep.subr.mxu0 0.0
    %209 = vmatpush1.msra.mxu0 0.0
    %210 = vmatprep.subr.mxu0 0.0
    %211 = vmatpush1.msra.mxu0 0.0
    %212 = vmatprep.subr.mxu0 0.0
    %213 = vmatpush1.msra.mxu0 0.0
    %214 = vmatprep.subr.mxu0 0.0
    %215 = vmatpush1.msra.mxu0 0.0
    %216 = vmatprep.subr.mxu0 0.0
    %217 = vmatpush1.msra.mxu0 0.0
    %218 = vmatprep.subr.mxu0 0.0
    %219 = vmatpush1.msra.mxu0 0.0
    %220 = vmatprep.subr.mxu0 0.0
    %221 = vmatpush1.msra.mxu0 0.0
    %222 = vmatprep.subr.mxu0 0.0
    %223 = vmatpush1.msra.mxu0 0.0
    %224 = vmatprep.subr.mxu0 0.0
    %225 = vmatpush1.msra.mxu0 0.0
    %226 = vmatprep.subr.mxu0 0.0
    %227 = vmatpush1.msra.mxu0 0.0
    %228 = vmatprep.subr.mxu0 0.0
    %229 = vmatpush1.msra.mxu0 0.0
    %230 = vmatprep.subr.mxu0 0.0
    %231 = vmatpush1.msra.mxu0 0.0
    %232 = vmatprep.subr.mxu0 0.0
    %233 = vmatpush1.msra.mxu0 0.0
    %234 = vmatprep.subr.mxu0 0.0
    %235 = vmatpush1.msra.mxu0 0.0
    %236 = vmatprep.subr.mxu0 0.0
    %237 = vmatpush1.msra.mxu0 0.0
    %238 = vmatprep.subr.mxu0 0.0
    %239 = vmatpush1.msra.mxu0 0.0
    %240 = vmatprep.subr.mxu0 0.0
    %241 = vmatpush1.msra.mxu0 0.0
    %242 = vmatprep.subr.mxu0 0.0
    %243 = vmatpush1.msra.mxu0 0.0
    %244 = vmatprep.subr.mxu0 0.0
    %245 = vmatpush1.msra.mxu0 0.0
    %246 = vmatprep.subr.mxu0 0.0
    %247 = vmatpush1.msra.mxu0 0.0
    %248 = vmatprep.subr.mxu0 0.0
    %249 = vmatpush1.msra.mxu0 0.0
    %250 = vmatprep.subr.mxu0 0.0
    %251 = vmatpush1.msra.mxu0 0.0
    %252 = vmatprep.subr.mxu0 0.0
    %253 = vmatpush1.msra.mxu0 0.0
    %254 = vmatprep.subr.mxu0 0.0
    %255 = vmatpush1.msra.mxu0 0.0
    %256 = vmatprep.subr.mxu0 0.0
    %257 = vmatpush1.msra.mxu0 0.0
    %258 = vmatprep.subr.mxu0 0.0
    %259 = vmatpush1.msra.mxu0 0.0
    %260 = vmatprep.subr.mxu0 0.0
    %261 = vmatpush1.msra.mxu0 0.0
    %262 = vmatprep.subr.mxu0 0.0
    %263 = vmatpush1.msra.mxu0 0.0
    %264 = vmatprep.subr.mxu0 0.0
    %265 = vmatpush1.msra.mxu0 0.0
    %266 = vmatprep.mubr.f32.mxu0 0.0
    %267 = vmatmul.mubr.f32.gmra.mrb[0].mxu0 %v175
    %v268 = vpop.f32.mrb[0].mxu0
    %v269 = vadd.f32 0.0, %v268
    %v270 = vpop.f32.mrb[0].mxu0
    %271 = vmatprep.mubr.f32.mxu0 0.0
    %272 = vmatmul.mubr.f32.gmra.mrb[0].mxu0 %v178
    %v273 = vpop.f32.mrb[0].mxu0
    %v274 = vadd.f32 0.0, %v273
    %v275 = vpop.f32.mrb[0].mxu0
    %276 = vmatprep.mubr.f32.mxu0 0.0
    %277 = vmatmul.mubr.f32.gmra.mrb[0].mxu0 %v181
    %v278 = vpop.f32.mrb[0].mxu0
    %v279 = vadd.f32 0.0, %v278
    %v280 = vpop.f32.mrb[0].mxu0
    %281 = vmatprep.mubr.f32.mxu0 0.0
    %282 = vmatmul.mubr.f32.gmra.mrb[0].mxu0 %v184
    %v283 = vpop.f32.mrb[0].mxu0
    %v284 = vadd.f32 0.0, %v283
    %v285 = vpop.f32.mrb[0].mxu0
    %286 = vmatprep.mubr.f32.mxu0 0.0
    %287 = vmatmul.mubr.f32.gmra.mrb[0].mxu0 %v187
    %v288 = vpop.f32.mrb[0].mxu0
    %v289 = vadd.f32 0.0, %v288
    %v290 = vpop.f32.mrb[0].mxu0
    %291 = vmatprep.mubr.f32.mxu0 0.0
    %292 = vmatmul.mubr.f32.gmra.mrb[0].mxu0 %v190
    %v293 = vpop.f32.mrb[0].mxu0
    %v294 = vadd.f32 0.0, %v293
    %v295 = vpop.f32.mrb[0].mxu0
    %296 = vmatprep.mubr.f32.mxu0 0.0
    %297 = vmatmul.mubr.f32.gmra.mrb[0].mxu0 %v193
    %v298 = vpop.f32.mrb[0].mxu0
    %v299 = vadd.f32 0.0, %v298
    %v300 = vpop.f32.mrb[0].mxu0
    %301 = vmatprep.mubr.f32.mxu0 0.0
    %302 = vmatmul.mubr.f32.gmra.mrb[0].mxu0 %v196
    %v303 = vpop.f32.mrb[0].mxu0
    %v304 = vadd.f32 0.0, %v303
    %v305 = vpop.f32.mrb[0].mxu0
    %306 = vdwg.mxu0
    %v307 = vlaneseq
    %v308 = vshrl.u32 %v307, 7
    %v309 = vadd.s32 %v308, 8
    %v310 = vadd.s32 %v308, 16
    %v311 = vadd.s32 %v308, 24
    %v312 = vadd.s32 %v308, 32
    %v313 = vadd.s32 %v308, 40
    %v314 = vadd.s32 %v308, 48
    %v315 = vadd.s32 %v308, 56
    %v316 = vand.u32 %v308, 31
    %v317 = vand.u32 %v309, 31
    %v318 = vand.u32 %v310, 31
    %v319 = vand.u32 %v311, 31
    %v320 = vand.u32 %v312, 31
    %v321 = vand.u32 %v313, 31
    %v322 = vand.u32 %v314, 31
    %v323 = vand.u32 %v315, 31
    %vm324 = vcmp.eq.s32.totalorder %v316, 0
    %vm325 = vcmp.eq.s32.totalorder %v317, 0
    %vm326 = vcmp.eq.s32.totalorder %v318, 0
    %vm327 = vcmp.eq.s32.totalorder %v319, 0
    %vm328 = vcmp.eq.s32.totalorder %v320, 0
    %vm329 = vcmp.eq.s32.totalorder %v321, 0
    %vm330 = vcmp.eq.s32.totalorder %v322, 0
    %vm331 = vcmp.eq.s32.totalorder %v323, 0
    %v332 = vrot.slane %v269, 7
    %v333 = vrot.slane %v274, 7
    %v334 = vrot.slane %v279, 7
    %v335 = vrot.slane %v284, 7
    %v336 = vrot.slane %v289, 7
    %v337 = vrot.slane %v294, 7
    %v338 = vrot.slane %v299, 7
    %v339 = vrot.slane %v304, 7
    %vm340 = vcmp.lt.s32.totalorder %v308, 1
    %v341 = vsel %vm340, %v338, %v339
    %v342 = vsel %vm340, %v337, %v338
    %v343 = vsel %vm340, %v336, %v337
    %v344 = vsel %vm340, %v335, %v336
    %v345 = vsel %vm340, %v334, %v335
    %v346 = vsel %vm340, %v333, %v334
    %v347 = vsel %vm340, %v332, %v333
    %v348 = vsel %vm340, %v339, %v332
    %v349 = vsel %vm324, 1, 0
    %v350 = vsel %vm325, 1, 0
    %v351 = vsel %vm326, 1, 0
    %v352 = vsel %vm327, 1, 0
    %v353 = vsel %vm328, 1, 0
    %v354 = vsel %vm329, 1, 0
    %v355 = vsel %vm330, 1, 0
    %v356 = vsel %vm331, 1, 0
    %vm357 = vcmp.eq.s32.totalorder %v349, 1
    %vm358 = vcmp.eq.s32.totalorder %v350, 1
    %vm359 = vcmp.eq.s32.totalorder %v351, 1
    %vm360 = vcmp.eq.s32.totalorder %v352, 1
    %vm361 = vcmp.eq.s32.totalorder %v353, 1
    %vm362 = vcmp.eq.s32.totalorder %v354, 1
    %vm363 = vcmp.eq.s32.totalorder %v355, 1
    %vm364 = vcmp.eq.s32.totalorder %v356, 1
    %v365 = vsel %vm357, 0.0, %v348
    %v366 = vsel %vm358, 0.0, %v347
    %v367 = vsel %vm359, 0.0, %v346
    %v368 = vsel %vm360, 0.0, %v345
    %v369 = vsel %vm361, 0.0, %v344
    %v370 = vsel %vm362, 0.0, %v343
    %v371 = vsel %vm363, 0.0, %v342
    %v372 = vsel %vm364, 0.0, %v341
    %vm373 = vcmp.eq.s32.totalorder %v316, 31
    %vm374 = vcmp.eq.s32.totalorder %v317, 31
    %vm375 = vcmp.eq.s32.totalorder %v318, 31
    %vm376 = vcmp.eq.s32.totalorder %v319, 31
    %vm377 = vcmp.eq.s32.totalorder %v320, 31
    %vm378 = vcmp.eq.s32.totalorder %v321, 31
    %vm379 = vcmp.eq.s32.totalorder %v322, 31
    %vm380 = vcmp.eq.s32.totalorder %v323, 31
    %v381 = vrot.slane %v269, 1
    %v382 = vrot.slane %v274, 1
    %v383 = vrot.slane %v279, 1
    %v384 = vrot.slane %v284, 1
    %v385 = vrot.slane %v289, 1
    %v386 = vrot.slane %v294, 1
    %v387 = vrot.slane %v299, 1
    %v388 = vrot.slane %v304, 1
    %vm389 = vcmp.lt.s32.totalorder %v308, 7
    %v390 = vsel %vm389, %v387, %v388
    %v391 = vsel %vm389, %v386, %v387
    %v392 = vsel %vm389, %v385, %v386
    %v393 = vsel %vm389, %v384, %v385
    %v394 = vsel %vm389, %v383, %v384
    %v395 = vsel %vm389, %v382, %v383
    %v396 = vsel %vm389, %v381, %v382
    %v397 = vsel %vm389, %v388, %v381
    %v398 = vsel %vm373, 1, 0
    %v399 = vsel %vm374, 1, 0
    %v400 = vsel %vm375, 1, 0
    %v401 = vsel %vm376, 1, 0
    %v402 = vsel %vm377, 1, 0
    %v403 = vsel %vm378, 1, 0
    %v404 = vsel %vm379, 1, 0
    %v405 = vsel %vm380, 1, 0
    %vm406 = vcmp.eq.s32.totalorder %v398, 1
    %vm407 = vcmp.eq.s32.totalorder %v399, 1
    %vm408 = vcmp.eq.s32.totalorder %v400, 1
    %vm409 = vcmp.eq.s32.totalorder %v401, 1
    %vm410 = vcmp.eq.s32.totalorder %v402, 1
    %vm411 = vcmp.eq.s32.totalorder %v403, 1
    %vm412 = vcmp.eq.s32.totalorder %v404, 1
    %vm413 = vcmp.eq.s32.totalorder %v405, 1
    %v414 = vsel %vm406, 0.0, %v396
    %v415 = vsel %vm407, 0.0, %v395
    %v416 = vsel %vm408, 0.0, %v394
    %v417 = vsel %vm409, 0.0, %v393
    %v418 = vsel %vm410, 0.0, %v392
    %v419 = vsel %vm411, 0.0, %v391
    %v420 = vsel %vm412, 0.0, %v390
    %v421 = vsel %vm413, 0.0, %v397
    %v422 = vld [vmem:[%s5] sm:$0x1]
    %v423 = vlaneseq
    %v424 = vshrl.u32 %v423, 7
    %v425 = vsub.s32 0, %v424
    %v426 = vrot.slane %v422, %v425
    %v427 = vmul.f32 %v365, %v426
    %v428 = vmul.f32 %v366, %v426
    %v429 = vmul.f32 %v367, %v426
    %v430 = vmul.f32 %v368, %v426
    %v431 = vmul.f32 %v369, %v426
    %v432 = vmul.f32 %v370, %v426
    %v433 = vmul.f32 %v371, %v426
    %v434 = vmul.f32 %v372, %v426
    %v435 = vld [vmem:[%s5 + $0x1] sm:$0x1]
    %v436 = vlaneseq
    %v437 = vshrl.u32 %v436, 7
    %v438 = vsub.s32 0, %v437
    %v439 = vrot.slane %v435, %v438
    %v440 = vmul.f32 %v269, %v439
    %v441 = vmul.f32 %v274, %v439
    %v442 = vmul.f32 %v279, %v439
    %v443 = vmul.f32 %v284, %v439
    %v444 = vmul.f32 %v289, %v439
    %v445 = vmul.f32 %v294, %v439
    %v446 = vmul.f32 %v299, %v439
    %v447 = vmul.f32 %v304, %v439
    %v448 = vadd.f32 %v427, %v440
    %v449 = vadd.f32 %v428, %v441
    %v450 = vadd.f32 %v429, %v442
    %v451 = vadd.f32 %v430, %v443
    %v452 = vadd.f32 %v431, %v444
    %v453 = vadd.f32 %v432, %v445
    %v454 = vadd.f32 %v433, %v446
    %v455 = vadd.f32 %v434, %v447
    %v456 = vld [vmem:[%s5 + $0x2] sm:$0x1]
    %v457 = vlaneseq
    %v458 = vshrl.u32 %v457, 7
    %v459 = vsub.s32 0, %v458
    %v460 = vrot.slane %v456, %v459
    %v461 = vmul.f32 %v414, %v460
    %v462 = vmul.f32 %v415, %v460
    %v463 = vmul.f32 %v416, %v460
    %v464 = vmul.f32 %v417, %v460
    %v465 = vmul.f32 %v418, %v460
    %v466 = vmul.f32 %v419, %v460
    %v467 = vmul.f32 %v420, %v460
    %v468 = vmul.f32 %v421, %v460
    %v469 = vadd.f32 %v448, %v461
    %v470 = vadd.f32 %v449, %v462
    %v471 = vadd.f32 %v450, %v463
    %v472 = vadd.f32 %v451, %v464
    %v473 = vadd.f32 %v452, %v465
    %v474 = vadd.f32 %v453, %v466
    %v475 = vadd.f32 %v454, %v467
    %v476 = vadd.f32 %v455, %v468
    %v477 = vld [vmem:[%s6] sm:$0x1]
    %v479 = vlaneseq
    %v480 = vshrl.u32 %v479, 7
    %v481 = vsub.s32 0, %v480
    %v482 = vrot.slane %v477, %v481
    %v484 = vadd.f32 %v469, %v482
    %v485 = vadd.f32 %v470, %v482
    %v486 = vadd.f32 %v471, %v482
    %v487 = vadd.f32 %v472, %v482
    %v488 = vadd.f32 %v473, %v482
    %v489 = vadd.f32 %v474, %v482
    %v490 = vadd.f32 %v475, %v482
    %v491 = vadd.f32 %v476, %v482
    %v492 = vlaneseq
    %v493 = vand.u32 %v492, 127
    %vm494 = vcmp.ge.s32.totalorder %v493, 0
    %vm495 = vcmp.lt.s32.totalorder %v493, 2
    %vm496 = vmand %vm494, %vm495
    %v497 = vsel %vm496, 1, 0
    %v498 = vcvt.s32.f32 %v497
    %vm499 = vcmp.ge.s32.totalorder %v493, 2
    %vm500 = vcmp.lt.s32.totalorder %v493, 4
    %vm501 = vmand %vm499, %vm500
    %v502 = vsel %vm501, 1, 0
    %v503 = vcvt.s32.f32 %v502
    %505 = vrot.lane.b32.xlu0 %v498, 4
    %v506 = vpop.permute.xlu0 %505
    %v508 = vmul.f32 %v484, %v506
    %v509 = vmul.f32 %v485, %v506
    %v510 = vmul.f32 %v486, %v506
    %v511 = vmul.f32 %v487, %v506
    %v512 = vmul.f32 %v488, %v506
    %v513 = vmul.f32 %v489, %v506
    %v514 = vmul.f32 %v490, %v506
    %v515 = vmul.f32 %v491, %v506
    %517 = vrot.lane.b32.xlu0 %v503, 4
    %v518 = vpop.permute.xlu0 %517
    %v520 = vmul.f32 %v484, %v518
    %v521 = vmul.f32 %v485, %v518
    %v522 = vmul.f32 %v486, %v518
    %v523 = vmul.f32 %v487, %v518
    %v524 = vmul.f32 %v488, %v518
    %v525 = vmul.f32 %v489, %v518
    %v526 = vmul.f32 %v490, %v518
    %v527 = vmul.f32 %v491, %v518
    %528 = vrot.lane.b32.xlu0 %v498, 8
    %v529 = vpop.permute.xlu0 %528
    %v531 = vmul.f32 %v484, %v529
    %v532 = vmul.f32 %v485, %v529
    %v533 = vmul.f32 %v486, %v529
    %v534 = vmul.f32 %v487, %v529
    %v535 = vmul.f32 %v488, %v529
    %v536 = vmul.f32 %v489, %v529
    %v537 = vmul.f32 %v490, %v529
    %v538 = vmul.f32 %v491, %v529
    %539 = vrot.lane.b32.xlu0 %v503, 8
    %v540 = vpop.permute.xlu0 %539
    %v542 = vmul.f32 %v484, %v540
    %v543 = vmul.f32 %v485, %v540
    %v544 = vmul.f32 %v486, %v540
    %v545 = vmul.f32 %v487, %v540
    %v546 = vmul.f32 %v488, %v540
    %v547 = vmul.f32 %v489, %v540
    %v548 = vmul.f32 %v490, %v540
    %v549 = vmul.f32 %v491, %v540
    %v550 = vand.u32 %v493, 63
    %vm551 = vcmp.gt.s32.totalorder %v550, %v308
    %vm552 = vcmp.gt.s32.totalorder %v550, %v309
    %vm553 = vcmp.gt.s32.totalorder %v550, %v310
    %vm554 = vcmp.gt.s32.totalorder %v550, %v311
    %vm555 = vcmp.gt.s32.totalorder %v550, %v312
    %vm556 = vcmp.gt.s32.totalorder %v550, %v313
    %vm557 = vcmp.gt.s32.totalorder %v550, %v314
    %vm558 = vcmp.gt.s32.totalorder %v550, %v315
    %v559 = vsub.s32 %v308, %v316
    %v560 = vsub.s32 %v309, %v317
    %v561 = vsub.s32 %v310, %v318
    %v562 = vsub.s32 %v311, %v319
    %v563 = vsub.s32 %v312, %v320
    %v564 = vsub.s32 %v313, %v321
    %v565 = vsub.s32 %v314, %v322
    %v566 = vsub.s32 %v315, %v323
    %vm567 = vcmp.lt.s32.totalorder %v550, %v559
    %vm568 = vcmp.lt.s32.totalorder %v550, %v560
    %vm569 = vcmp.lt.s32.totalorder %v550, %v561
    %vm570 = vcmp.lt.s32.totalorder %v550, %v562
    %vm571 = vcmp.lt.s32.totalorder %v550, %v563
    %vm572 = vcmp.lt.s32.totalorder %v550, %v564
    %vm573 = vcmp.lt.s32.totalorder %v550, %v565
    %vm574 = vcmp.lt.s32.totalorder %v550, %v566
    %vm575 = vmor %vm551, %vm567
    %vm576 = vmor %vm552, %vm568
    %vm577 = vmor %vm553, %vm569
    %vm578 = vmor %vm554, %vm570
    %vm579 = vmor %vm555, %vm571
    %vm580 = vmor %vm556, %vm572
    %vm581 = vmor %vm557, %vm573
    %vm582 = vmor %vm558, %vm574
    %v583 = vsel %vm575, -1e+30, 0.0
    %v584 = vsel %vm576, -1e+30, 0.0
    %v585 = vsel %vm577, -1e+30, 0.0
    %v586 = vsel %vm578, -1e+30, 0.0
    %v587 = vsel %vm579, -1e+30, 0.0
    %v588 = vsel %vm580, -1e+30, 0.0
    %v589 = vsel %vm581, -1e+30, 0.0
    %v590 = vsel %vm582, -1e+30, 0.0
    %607 = vrot.lane.b32.xlu0 %v508, 124
    %v608 = vpop.permute.xlu0 %607
    %609 = vrot.lane.b32.xlu0 %v509, 124
    %v610 = vpop.permute.xlu0 %609
    %611 = vrot.lane.b32.xlu0 %v510, 124
    %v612 = vpop.permute.xlu0 %611
    %613 = vrot.lane.b32.xlu0 %v511, 124
    %v614 = vpop.permute.xlu0 %613
    %615 = vrot.lane.b32.xlu0 %v512, 124
    %v616 = vpop.permute.xlu0 %615
    %617 = vrot.lane.b32.xlu0 %v513, 124
    %v618 = vpop.permute.xlu0 %617
    %619 = vrot.lane.b32.xlu0 %v514, 124
    %v620 = vpop.permute.xlu0 %619
    %621 = vrot.lane.b32.xlu0 %v515, 124
    %v622 = vpop.permute.xlu0 %621
    %623 = vrot.lane.b32.xlu0 %v520, 124
    %v624 = vpop.permute.xlu0 %623
    %625 = vrot.lane.b32.xlu0 %v521, 124
    %v626 = vpop.permute.xlu0 %625
    %627 = vrot.lane.b32.xlu0 %v522, 124
    %v628 = vpop.permute.xlu0 %627
    %629 = vrot.lane.b32.xlu0 %v523, 124
    %v630 = vpop.permute.xlu0 %629
    %631 = vrot.lane.b32.xlu0 %v524, 124
    %v632 = vpop.permute.xlu0 %631
    %633 = vrot.lane.b32.xlu0 %v525, 124
    %v634 = vpop.permute.xlu0 %633
    %635 = vrot.lane.b32.xlu0 %v526, 124
    %v636 = vpop.permute.xlu0 %635
    %637 = vrot.lane.b32.xlu0 %v527, 124
    %v638 = vpop.permute.xlu0 %637
    %v640 = vsel %vm37, %v484, 0
    %v643 = vsel %vm37, %v485, 0
    %v646 = vsel %vm37, %v486, 0
    %v649 = vsel %vm37, %v487, 0
    %v652 = vsel %vm37, %v488, 0
    %v655 = vsel %vm37, %v489, 0
    %v658 = vsel %vm37, %v490, 0
    %v661 = vsel %vm37, %v491, 0
    %v663 = vsel %vm37, %v608, 0
    %v665 = vsel %vm37, %v610, 0
    %v667 = vsel %vm37, %v612, 0
    %v669 = vsel %vm37, %v614, 0
    %v671 = vsel %vm37, %v616, 0
    %v673 = vsel %vm37, %v618, 0
    %v675 = vsel %vm37, %v620, 0
    %v677 = vsel %vm37, %v622, 0
    %v679 = vsel %vm37, %v624, 0
    %v681 = vsel %vm37, %v626, 0
    %v683 = vsel %vm37, %v628, 0
    %v685 = vsel %vm37, %v630, 0
    %v687 = vsel %vm37, %v632, 0
    %v689 = vsel %vm37, %v634, 0
    %v691 = vsel %vm37, %v636, 0
    %v693 = vsel %vm37, %v638, 0
    %695 = vmatprep.subr.mxu0 0.0
    %696 = vmatpush1.xpose.msra.mxu0 %v663
    %697 = vmatprep.subr.mxu0 0.0
    %698 = vmatpush1.xpose.msra.mxu0 %v665
    %699 = vmatprep.subr.mxu0 0.0
    %700 = vmatpush1.xpose.msra.mxu0 %v667
    %701 = vmatprep.subr.mxu0 0.0
    %702 = vmatpush1.xpose.msra.mxu0 %v669
    %703 = vmatprep.subr.mxu0 0.0
    %704 = vmatpush1.xpose.msra.mxu0 %v671
    %705 = vmatprep.subr.mxu0 0.0
    %706 = vmatpush1.xpose.msra.mxu0 %v673
    %707 = vmatprep.subr.mxu0 0.0
    %708 = vmatpush1.xpose.msra.mxu0 %v675
    %709 = vmatprep.subr.mxu0 0.0
    %710 = vmatpush1.xpose.msra.mxu0 %v677
    %711 = vmatprep.subr.mxu0 0.0
    %712 = vmatpush1.xpose.msra.mxu0 %v679
    %713 = vmatprep.subr.mxu0 0.0
    %714 = vmatpush1.xpose.msra.mxu0 %v681
    %715 = vmatprep.subr.mxu0 0.0
    %716 = vmatpush1.xpose.msra.mxu0 %v683
    %717 = vmatprep.subr.mxu0 0.0
    %718 = vmatpush1.xpose.msra.mxu0 %v685
    %719 = vmatprep.subr.mxu0 0.0
    %720 = vmatpush1.xpose.msra.mxu0 %v687
    %721 = vmatprep.subr.mxu0 0.0
    %722 = vmatpush1.xpose.msra.mxu0 %v689
    %723 = vmatprep.subr.mxu0 0.0
    %724 = vmatpush1.xpose.msra.mxu0 %v691
    %725 = vmatprep.subr.mxu0 0.0
    %726 = vmatpush1.xpose.msra.mxu0 %v693
    %727 = vmatprep.subr.mxu0 0.0
    %728 = vmatpush1.xpose.msra.mxu0 0.0
    %729 = vmatprep.subr.mxu0 0.0
    %730 = vmatpush1.xpose.msra.mxu0 0.0
    %731 = vmatprep.subr.mxu0 0.0
    %732 = vmatpush1.xpose.msra.mxu0 0.0
    %733 = vmatprep.subr.mxu0 0.0
    %734 = vmatpush1.xpose.msra.mxu0 0.0
    %735 = vmatprep.subr.mxu0 0.0
    %736 = vmatpush1.xpose.msra.mxu0 0.0
    %737 = vmatprep.subr.mxu0 0.0
    %738 = vmatpush1.xpose.msra.mxu0 0.0
    %739 = vmatprep.subr.mxu0 0.0
    %740 = vmatpush1.xpose.msra.mxu0 0.0
    %741 = vmatprep.subr.mxu0 0.0
    %742 = vmatpush1.xpose.msra.mxu0 0.0
    %743 = vmatprep.subr.mxu0 0.0
    %744 = vmatpush1.xpose.msra.mxu0 0.0
    %745 = vmatprep.subr.mxu0 0.0
    %746 = vmatpush1.xpose.msra.mxu0 0.0
    %747 = vmatprep.subr.mxu0 0.0
    %748 = vmatpush1.xpose.msra.mxu0 0.0
    %749 = vmatprep.subr.mxu0 0.0
    %750 = vmatpush1.xpose.msra.mxu0 0.0
    %751 = vmatprep.subr.mxu0 0.0
    %752 = vmatpush1.xpose.msra.mxu0 0.0
    %753 = vmatprep.subr.mxu0 0.0
    %754 = vmatpush1.xpose.msra.mxu0 0.0
    %755 = vmatprep.subr.mxu0 0.0
    %756 = vmatpush1.xpose.msra.mxu0 0.0
    %757 = vmatprep.subr.mxu0 0.0
    %758 = vmatpush1.xpose.msra.mxu0 0.0
    %759 = vmatprep.mubr.f32.mxu0 0.0
    %760 = vmatmul.mubr.f32.gmra.mrb[0].mxu0 %v640
    %v761 = vpop.f32.mrb[0].mxu0
    %v762 = vadd.f32 %v583, %v761
    %v763 = vpop.f32.mrb[0].mxu0
    %764 = vmatprep.mubr.f32.mxu0 0.0
    %765 = vmatmul.mubr.f32.gmra.mrb[0].mxu0 %v643
    %v766 = vpop.f32.mrb[0].mxu0
    %v767 = vadd.f32 %v584, %v766
    %v768 = vpop.f32.mrb[0].mxu0
    %769 = vmatprep.mubr.f32.mxu0 0.0
    %770 = vmatmul.mubr.f32.gmra.mrb[0].mxu0 %v646
    %v771 = vpop.f32.mrb[0].mxu0
    %v772 = vadd.f32 %v585, %v771
    %v773 = vpop.f32.mrb[0].mxu0
    %774 = vmatprep.mubr.f32.mxu0 0.0
    %775 = vmatmul.mubr.f32.gmra.mrb[0].mxu0 %v649
    %v776 = vpop.f32.mrb[0].mxu0
    %v777 = vadd.f32 %v586, %v776
    %v778 = vpop.f32.mrb[0].mxu0
    %779 = vmatprep.mubr.f32.mxu0 0.0
    %780 = vmatmul.mubr.f32.gmra.mrb[0].mxu0 %v652
    %v781 = vpop.f32.mrb[0].mxu0
    %v782 = vadd.f32 %v587, %v781
    %v783 = vpop.f32.mrb[0].mxu0
    %784 = vmatprep.mubr.f32.mxu0 0.0
    %785 = vmatmul.mubr.f32.gmra.mrb[0].mxu0 %v655
    %v786 = vpop.f32.mrb[0].mxu0
    %v787 = vadd.f32 %v588, %v786
    %v788 = vpop.f32.mrb[0].mxu0
    %789 = vmatprep.mubr.f32.mxu0 0.0
    %790 = vmatmul.mubr.f32.gmra.mrb[0].mxu0 %v658
    %v791 = vpop.f32.mrb[0].mxu0
    %v792 = vadd.f32 %v589, %v791
    %v793 = vpop.f32.mrb[0].mxu0
    %794 = vmatprep.mubr.f32.mxu0 0.0
    %795 = vmatmul.mubr.f32.gmra.mrb[0].mxu0 %v661
    %v796 = vpop.f32.mrb[0].mxu0
    %v797 = vadd.f32 %v590, %v796
    %v798 = vpop.f32.mrb[0].mxu0
    %799 = vdwg.mxu0
    %vm800 = vcmp.lt.s32.totalorder %v493, 64
    %vm801 = vmand %vm494, %vm800
    %vm802 = vcmp.ge.s32.totalorder %v493, 64
    %vm803 = vcmp.lt.s32.totalorder %v493, 128
    %vm804 = vmand %vm802, %vm803
    %v805 = vsel %vm801, 1, 0
    %vm806 = vcmp.eq.s32.totalorder %v805, 1
    %v807 = vsel %vm806, %v762, -1e+30
    %v808 = vsel %vm806, %v767, -1e+30
    %v809 = vsel %vm806, %v772, -1e+30
    %v810 = vsel %vm806, %v777, -1e+30
    %v811 = vsel %vm806, %v782, -1e+30
    %v812 = vsel %vm806, %v787, -1e+30
    %v813 = vsel %vm806, %v792, -1e+30
    %v814 = vsel %vm806, %v797, -1e+30
    %815 = vmax.xlane.f32.xlu0 %v807
    %v816 = vpop.xlane.xlu0 %815
    %817 = vmax.xlane.f32.xlu0 %v808
    %v818 = vpop.xlane.xlu0 %817
    %819 = vmax.xlane.f32.xlu0 %v809
    %v820 = vpop.xlane.xlu0 %819
    %821 = vmax.xlane.f32.xlu0 %v810
    %v822 = vpop.xlane.xlu0 %821
    %823 = vmax.xlane.f32.xlu0 %v811
    %v824 = vpop.xlane.xlu0 %823
    %825 = vmax.xlane.f32.xlu0 %v812
    %v826 = vpop.xlane.xlu0 %825
    %827 = vmax.xlane.f32.xlu0 %v813
    %v828 = vpop.xlane.xlu0 %827
    %829 = vmax.xlane.f32.xlu0 %v814
    %v830 = vpop.xlane.xlu0 %829
    %v831 = vsel %vm806, %v816, 0.0
    %v832 = vsel %vm806, %v818, 0.0
    %v833 = vsel %vm806, %v820, 0.0
    %v834 = vsel %vm806, %v822, 0.0
    %v835 = vsel %vm806, %v824, 0.0
    %v836 = vsel %vm806, %v826, 0.0
    %v837 = vsel %vm806, %v828, 0.0
    %v838 = vsel %vm806, %v830, 0.0
    %v839 = vsel %vm804, 1, 0
    %vm840 = vcmp.eq.s32.totalorder %v839, 1
    %v841 = vsel %vm840, %v762, -1e+30
    %v842 = vsel %vm840, %v767, -1e+30
    %v843 = vsel %vm840, %v772, -1e+30
    %v844 = vsel %vm840, %v777, -1e+30
    %v845 = vsel %vm840, %v782, -1e+30
    %v846 = vsel %vm840, %v787, -1e+30
    %v847 = vsel %vm840, %v792, -1e+30
    %v848 = vsel %vm840, %v797, -1e+30
    %849 = vmax.xlane.f32.xlu0 %v841
    %v850 = vpop.xlane.xlu0 %849
    %851 = vmax.xlane.f32.xlu0 %v842
    %v852 = vpop.xlane.xlu0 %851
    %853 = vmax.xlane.f32.xlu0 %v843
    %v854 = vpop.xlane.xlu0 %853
    %855 = vmax.xlane.f32.xlu0 %v844
    %v856 = vpop.xlane.xlu0 %855
    %857 = vmax.xlane.f32.xlu0 %v845
    %v858 = vpop.xlane.xlu0 %857
    %859 = vmax.xlane.f32.xlu0 %v846
    %v860 = vpop.xlane.xlu0 %859
    %861 = vmax.xlane.f32.xlu0 %v847
    %v862 = vpop.xlane.xlu0 %861
    %863 = vmax.xlane.f32.xlu0 %v848
    %v864 = vpop.xlane.xlu0 %863
    %v865 = vsel %vm840, %v850, %v831
    %v866 = vsel %vm840, %v852, %v832
    %v867 = vsel %vm840, %v854, %v833
    %v868 = vsel %vm840, %v856, %v834
    %v869 = vsel %vm840, %v858, %v835
    %v870 = vsel %vm840, %v860, %v836
    %v871 = vsel %vm840, %v862, %v837
    %v872 = vsel %vm840, %v864, %v838
    %v873 = vsub.f32 %v762, %v865
    %v874 = vsub.f32 %v767, %v866
    %v875 = vsub.f32 %v772, %v867
    %v876 = vsub.f32 %v777, %v868
    %v877 = vsub.f32 %v782, %v869
    %v878 = vsub.f32 %v787, %v870
    %v879 = vsub.f32 %v792, %v871
    %v880 = vsub.f32 %v797, %v872
    %v881 = vmul.f32 %v873, 1.442695
    %v882 = vpow.pop %v881
    %v883 = vmul.f32 %v874, 1.442695
    %v884 = vpow.pop %v883
    %v885 = vmul.f32 %v875, 1.442695
    %v886 = vpow.pop %v885
    %v887 = vmul.f32 %v876, 1.442695
    %v888 = vpow.pop %v887
    %v889 = vmul.f32 %v877, 1.442695
    %v890 = vpow.pop %v889
    %v891 = vmul.f32 %v878, 1.442695
    %v892 = vpow.pop %v891
    %v893 = vmul.f32 %v879, 1.442695
    %v894 = vpow.pop %v893
    %v895 = vmul.f32 %v880, 1.442695
    %v896 = vpow.pop %v895
    %v897 = vsel %vm806, %v882, 0.0
    %v898 = vsel %vm806, %v884, 0.0
    %v899 = vsel %vm806, %v886, 0.0
    %v900 = vsel %vm806, %v888, 0.0
    %v901 = vsel %vm806, %v890, 0.0
    %v902 = vsel %vm806, %v892, 0.0
    %v903 = vsel %vm806, %v894, 0.0
    %v904 = vsel %vm806, %v896, 0.0
    %905 = vadd.xlane.f32.xlu0 %v897
    %v906 = vpop.xlane.xlu0 %905
    %907 = vadd.xlane.f32.xlu0 %v898
    %v908 = vpop.xlane.xlu0 %907
    %909 = vadd.xlane.f32.xlu0 %v899
    %v910 = vpop.xlane.xlu0 %909
    %911 = vadd.xlane.f32.xlu0 %v900
    %v912 = vpop.xlane.xlu0 %911
    %913 = vadd.xlane.f32.xlu0 %v901
    %v914 = vpop.xlane.xlu0 %913
    %915 = vadd.xlane.f32.xlu0 %v902
    %v916 = vpop.xlane.xlu0 %915
    %917 = vadd.xlane.f32.xlu0 %v903
    %v918 = vpop.xlane.xlu0 %917
    %919 = vadd.xlane.f32.xlu0 %v904
    %v920 = vpop.xlane.xlu0 %919
    %v921 = vrcp.pop %v906
    %v922 = vrcp.pop %v908
    %v923 = vrcp.pop %v910
    %v924 = vrcp.pop %v912
    %v925 = vrcp.pop %v914
    %v926 = vrcp.pop %v916
    %v927 = vrcp.pop %v918
    %v928 = vrcp.pop %v920
    %v929 = vmul.f32 %v906, %v921
    %v930 = vmul.f32 %v908, %v922
    %v931 = vmul.f32 %v910, %v923
    %v932 = vmul.f32 %v912, %v924
    %v933 = vmul.f32 %v914, %v925
    %v934 = vmul.f32 %v916, %v926
    %v935 = vmul.f32 %v918, %v927
    %v936 = vmul.f32 %v920, %v928
    %v937 = vsub.f32 2.0, %v929
    %v938 = vsub.f32 2.0, %v930
    %v939 = vsub.f32 2.0, %v931
    %v940 = vsub.f32 2.0, %v932
    %v941 = vsub.f32 2.0, %v933
    %v942 = vsub.f32 2.0, %v934
    %v943 = vsub.f32 2.0, %v935
    %v944 = vsub.f32 2.0, %v936
    %v945 = vmul.f32 %v921, %v937
    %v946 = vmul.f32 %v922, %v938
    %v947 = vmul.f32 %v923, %v939
    %v948 = vmul.f32 %v924, %v940
    %v949 = vmul.f32 %v925, %v941
    %v950 = vmul.f32 %v926, %v942
    %v951 = vmul.f32 %v927, %v943
    %v952 = vmul.f32 %v928, %v944
    %v953 = vsel %vm806, %v945, 0.0
    %v954 = vsel %vm806, %v946, 0.0
    %v955 = vsel %vm806, %v947, 0.0
    %v956 = vsel %vm806, %v948, 0.0
    %v957 = vsel %vm806, %v949, 0.0
    %v958 = vsel %vm806, %v950, 0.0
    %v959 = vsel %vm806, %v951, 0.0
    %v960 = vsel %vm806, %v952, 0.0
    %v961 = vsel %vm840, %v882, 0.0
    %v962 = vsel %vm840, %v884, 0.0
    %v963 = vsel %vm840, %v886, 0.0
    %v964 = vsel %vm840, %v888, 0.0
    %v965 = vsel %vm840, %v890, 0.0
    %v966 = vsel %vm840, %v892, 0.0
    %v967 = vsel %vm840, %v894, 0.0
    %v968 = vsel %vm840, %v896, 0.0
    %969 = vadd.xlane.f32.xlu0 %v961
    %v970 = vpop.xlane.xlu0 %969
    %971 = vadd.xlane.f32.xlu0 %v962
    %v972 = vpop.xlane.xlu0 %971
    %973 = vadd.xlane.f32.xlu0 %v963
    %v974 = vpop.xlane.xlu0 %973
    %975 = vadd.xlane.f32.xlu0 %v964
    %v976 = vpop.xlane.xlu0 %975
    %977 = vadd.xlane.f32.xlu0 %v965
    %v978 = vpop.xlane.xlu0 %977
    %979 = vadd.xlane.f32.xlu0 %v966
    %v980 = vpop.xlane.xlu0 %979
    %981 = vadd.xlane.f32.xlu0 %v967
    %v982 = vpop.xlane.xlu0 %981
    %983 = vadd.xlane.f32.xlu0 %v968
    %v984 = vpop.xlane.xlu0 %983
    %v985 = vrcp.pop %v970
    %v986 = vrcp.pop %v972
    %v987 = vrcp.pop %v974
    %v988 = vrcp.pop %v976
    %v989 = vrcp.pop %v978
    %v990 = vrcp.pop %v980
    %v991 = vrcp.pop %v982
    %v992 = vrcp.pop %v984
    %v993 = vmul.f32 %v970, %v985
    %v994 = vmul.f32 %v972, %v986
    %v995 = vmul.f32 %v974, %v987
    %v996 = vmul.f32 %v976, %v988
    %v997 = vmul.f32 %v978, %v989
    %v998 = vmul.f32 %v980, %v990
    %v999 = vmul.f32 %v982, %v991
    %v1000 = vmul.f32 %v984, %v992
    %v1001 = vsub.f32 2.0, %v993
    %v1002 = vsub.f32 2.0, %v994
    %v1003 = vsub.f32 2.0, %v995
    %v1004 = vsub.f32 2.0, %v996
    %v1005 = vsub.f32 2.0, %v997
    %v1006 = vsub.f32 2.0, %v998
    %v1007 = vsub.f32 2.0, %v999
    %v1008 = vsub.f32 2.0, %v1000
    %v1009 = vmul.f32 %v985, %v1001
    %v1010 = vmul.f32 %v986, %v1002
    %v1011 = vmul.f32 %v987, %v1003
    %v1012 = vmul.f32 %v988, %v1004
    %v1013 = vmul.f32 %v989, %v1005
    %v1014 = vmul.f32 %v990, %v1006
    %v1015 = vmul.f32 %v991, %v1007
    %v1016 = vmul.f32 %v992, %v1008
    %v1017 = vsel %vm840, %v1009, %v953
    %v1018 = vsel %vm840, %v1010, %v954
    %v1019 = vsel %vm840, %v1011, %v955
    %v1020 = vsel %vm840, %v1012, %v956
    %v1021 = vsel %vm840, %v1013, %v957
    %v1022 = vsel %vm840, %v1014, %v958
    %v1023 = vsel %vm840, %v1015, %v959
    %v1024 = vsel %vm840, %v1016, %v960
    %v1025 = vmul.f32 %v882, %v1017
    %v1026 = vmul.f32 %v884, %v1018
    %v1027 = vmul.f32 %v886, %v1019
    %v1028 = vmul.f32 %v888, %v1020
    %v1029 = vmul.f32 %v890, %v1021
    %v1030 = vmul.f32 %v892, %v1022
    %v1031 = vmul.f32 %v894, %v1023
    %v1032 = vmul.f32 %v896, %v1024
    %1049 = vrot.lane.b32.xlu0 %v531, 120
    %v1050 = vpop.permute.xlu0 %1049
    %1051 = vrot.lane.b32.xlu0 %v532, 120
    %v1052 = vpop.permute.xlu0 %1051
    %1053 = vrot.lane.b32.xlu0 %v533, 120
    %v1054 = vpop.permute.xlu0 %1053
    %1055 = vrot.lane.b32.xlu0 %v534, 120
    %v1056 = vpop.permute.xlu0 %1055
    %1057 = vrot.lane.b32.xlu0 %v535, 120
    %v1058 = vpop.permute.xlu0 %1057
    %1059 = vrot.lane.b32.xlu0 %v536, 120
    %v1060 = vpop.permute.xlu0 %1059
    %1061 = vrot.lane.b32.xlu0 %v537, 120
    %v1062 = vpop.permute.xlu0 %1061
    %1063 = vrot.lane.b32.xlu0 %v538, 120
    %v1064 = vpop.permute.xlu0 %1063
    %1065 = vrot.lane.b32.xlu0 %v542, 120
    %v1066 = vpop.permute.xlu0 %1065
    %1067 = vrot.lane.b32.xlu0 %v543, 120
    %v1068 = vpop.permute.xlu0 %1067
    %1069 = vrot.lane.b32.xlu0 %v544, 120
    %v1070 = vpop.permute.xlu0 %1069
    %1071 = vrot.lane.b32.xlu0 %v545, 120
    %v1072 = vpop.permute.xlu0 %1071
    %1073 = vrot.lane.b32.xlu0 %v546, 120
    %v1074 = vpop.permute.xlu0 %1073
    %1075 = vrot.lane.b32.xlu0 %v547, 120
    %v1076 = vpop.permute.xlu0 %1075
    %1077 = vrot.lane.b32.xlu0 %v548, 120
    %v1078 = vpop.permute.xlu0 %1077
    %1079 = vrot.lane.b32.xlu0 %v549, 120
    %v1080 = vpop.permute.xlu0 %1079
    %1097 = vmatprep.subr.mxu0 0.0
    %1098 = vmatpush1.msra.mxu0 %v1050
    %1099 = vmatprep.subr.mxu0 0.0
    %1100 = vmatpush1.msra.mxu0 %v1052
    %1101 = vmatprep.subr.mxu0 0.0
    %1102 = vmatpush1.msra.mxu0 %v1054
    %1103 = vmatprep.subr.mxu0 0.0
    %1104 = vmatpush1.msra.mxu0 %v1056
    %1105 = vmatprep.subr.mxu0 0.0
    %1106 = vmatpush1.msra.mxu0 %v1058
    %1107 = vmatprep.subr.mxu0 0.0
    %1108 = vmatpush1.msra.mxu0 %v1060
    %1109 = vmatprep.subr.mxu0 0.0
    %1110 = vmatpush1.msra.mxu0 %v1062
    %1111 = vmatprep.subr.mxu0 0.0
    %1112 = vmatpush1.msra.mxu0 %v1064
    %1113 = vmatprep.subr.mxu0 0.0
    %1114 = vmatpush1.msra.mxu0 %v1066
    %1115 = vmatprep.subr.mxu0 0.0
    %1116 = vmatpush1.msra.mxu0 %v1068
    %1117 = vmatprep.subr.mxu0 0.0
    %1118 = vmatpush1.msra.mxu0 %v1070
    %1119 = vmatprep.subr.mxu0 0.0
    %1120 = vmatpush1.msra.mxu0 %v1072
    %1121 = vmatprep.subr.mxu0 0.0
    %1122 = vmatpush1.msra.mxu0 %v1074
    %1123 = vmatprep.subr.mxu0 0.0
    %1124 = vmatpush1.msra.mxu0 %v1076
    %1125 = vmatprep.subr.mxu0 0.0
    %1126 = vmatpush1.msra.mxu0 %v1078
    %1127 = vmatprep.subr.mxu0 0.0
    %1128 = vmatpush1.msra.mxu0 %v1080
    %1129 = vmatprep.subr.mxu0 0.0
    %1130 = vmatpush1.msra.mxu0 0.0
    %1131 = vmatprep.subr.mxu0 0.0
    %1132 = vmatpush1.msra.mxu0 0.0
    %1133 = vmatprep.subr.mxu0 0.0
    %1134 = vmatpush1.msra.mxu0 0.0
    %1135 = vmatprep.subr.mxu0 0.0
    %1136 = vmatpush1.msra.mxu0 0.0
    %1137 = vmatprep.subr.mxu0 0.0
    %1138 = vmatpush1.msra.mxu0 0.0
    %1139 = vmatprep.subr.mxu0 0.0
    %1140 = vmatpush1.msra.mxu0 0.0
    %1141 = vmatprep.subr.mxu0 0.0
    %1142 = vmatpush1.msra.mxu0 0.0
    %1143 = vmatprep.subr.mxu0 0.0
    %1144 = vmatpush1.msra.mxu0 0.0
    %1145 = vmatprep.subr.mxu0 0.0
    %1146 = vmatpush1.msra.mxu0 0.0
    %1147 = vmatprep.subr.mxu0 0.0
    %1148 = vmatpush1.msra.mxu0 0.0
    %1149 = vmatprep.subr.mxu0 0.0
    %1150 = vmatpush1.msra.mxu0 0.0
    %1151 = vmatprep.subr.mxu0 0.0
    %1152 = vmatpush1.msra.mxu0 0.0
    %1153 = vmatprep.subr.mxu0 0.0
    %1154 = vmatpush1.msra.mxu0 0.0
    %1155 = vmatprep.subr.mxu0 0.0
    %1156 = vmatpush1.msra.mxu0 0.0
    %1157 = vmatprep.subr.mxu0 0.0
    %1158 = vmatpush1.msra.mxu0 0.0
    %1159 = vmatprep.subr.mxu0 0.0
    %1160 = vmatpush1.msra.mxu0 0.0
    %1161 = vmatprep.mubr.f32.mxu0 0.0
    %1162 = vmatmul.mubr.f32.gmra.mrb[0].mxu0 %v1025
    %v1163 = vpop.f32.mrb[0].mxu0
    %v1164 = vadd.f32 0.0, %v1163
    %v1165 = vpop.f32.mrb[0].mxu0
    %1166 = vmatprep.mubr.f32.mxu0 0.0
    %1167 = vmatmul.mubr.f32.gmra.mrb[0].mxu0 %v1026
    %v1168 = vpop.f32.mrb[0].mxu0
    %v1169 = vadd.f32 0.0, %v1168
    %v1170 = vpop.f32.mrb[0].mxu0
    %1171 = vmatprep.mubr.f32.mxu0 0.0
    %1172 = vmatmul.mubr.f32.gmra.mrb[0].mxu0 %v1027
    %v1173 = vpop.f32.mrb[0].mxu0
    %v1174 = vadd.f32 0.0, %v1173
    %v1175 = vpop.f32.mrb[0].mxu0
    %1176 = vmatprep.mubr.f32.mxu0 0.0
    %1177 = vmatmul.mubr.f32.gmra.mrb[0].mxu0 %v1028
    %v1178 = vpop.f32.mrb[0].mxu0
    %v1179 = vadd.f32 0.0, %v1178
    %v1180 = vpop.f32.mrb[0].mxu0
    %1181 = vmatprep.mubr.f32.mxu0 0.0
    %1182 = vmatmul.mubr.f32.gmra.mrb[0].mxu0 %v1029
    %v1183 = vpop.f32.mrb[0].mxu0
    %v1184 = vadd.f32 0.0, %v1183
    %v1185 = vpop.f32.mrb[0].mxu0
    %1186 = vmatprep.mubr.f32.mxu0 0.0
    %1187 = vmatmul.mubr.f32.gmra.mrb[0].mxu0 %v1030
    %v1188 = vpop.f32.mrb[0].mxu0
    %v1189 = vadd.f32 0.0, %v1188
    %v1190 = vpop.f32.mrb[0].mxu0
    %1191 = vmatprep.mubr.f32.mxu0 0.0
    %1192 = vmatmul.mubr.f32.gmra.mrb[0].mxu0 %v1031
    %v1193 = vpop.f32.mrb[0].mxu0
    %v1194 = vadd.f32 0.0, %v1193
    %v1195 = vpop.f32.mrb[0].mxu0
    %1196 = vmatprep.mubr.f32.mxu0 0.0
    %1197 = vmatmul.mubr.f32.gmra.mrb[0].mxu0 %v1032
    %v1198 = vpop.f32.mrb[0].mxu0
    %v1199 = vadd.f32 0.0, %v1198
    %v1200 = vpop.f32.mrb[0].mxu0
    %1201 = vdwg.mxu0
    %v1202 = vld [vmem:[%s4] sm:$0xf]
    %v1204 = vsel %vm37, %v1164, 0
    %v1207 = vsel %vm37, %v1169, 0
    %v1210 = vsel %vm37, %v1174, 0
    %v1213 = vsel %vm37, %v1179, 0
    %v1216 = vsel %vm37, %v1184, 0
    %v1219 = vsel %vm37, %v1189, 0
    %v1222 = vsel %vm37, %v1194, 0
    %v1225 = vsel %vm37, %v1199, 0
    %v1228 = vsel %vm198, %v1202, 0
    %1230 = vmatprep.subr.mxu0 0.0
    %1231 = vmatpush1.msra.mxu0 %v1228
    %1232 = vmatprep.subr.mxu0 0.0
    %1233 = vmatpush1.msra.mxu0 0.0
    %1234 = vmatprep.subr.mxu0 0.0
    %1235 = vmatpush1.msra.mxu0 0.0
    %1236 = vmatprep.subr.mxu0 0.0
    %1237 = vmatpush1.msra.mxu0 0.0
    %1238 = vmatprep.subr.mxu0 0.0
    %1239 = vmatpush1.msra.mxu0 0.0
    %1240 = vmatprep.subr.mxu0 0.0
    %1241 = vmatpush1.msra.mxu0 0.0
    %1242 = vmatprep.subr.mxu0 0.0
    %1243 = vmatpush1.msra.mxu0 0.0
    %1244 = vmatprep.subr.mxu0 0.0
    %1245 = vmatpush1.msra.mxu0 0.0
    %1246 = vmatprep.subr.mxu0 0.0
    %1247 = vmatpush1.msra.mxu0 0.0
    %1248 = vmatprep.subr.mxu0 0.0
    %1249 = vmatpush1.msra.mxu0 0.0
    %1250 = vmatprep.subr.mxu0 0.0
    %1251 = vmatpush1.msra.mxu0 0.0
    %1252 = vmatprep.subr.mxu0 0.0
    %1253 = vmatpush1.msra.mxu0 0.0
    %1254 = vmatprep.subr.mxu0 0.0
    %1255 = vmatpush1.msra.mxu0 0.0
    %1256 = vmatprep.subr.mxu0 0.0
    %1257 = vmatpush1.msra.mxu0 0.0
    %1258 = vmatprep.subr.mxu0 0.0
    %1259 = vmatpush1.msra.mxu0 0.0
    %1260 = vmatprep.subr.mxu0 0.0
    %1261 = vmatpush1.msra.mxu0 0.0
    %1262 = vmatprep.subr.mxu0 0.0
    %1263 = vmatpush1.msra.mxu0 0.0
    %1264 = vmatprep.subr.mxu0 0.0
    %1265 = vmatpush1.msra.mxu0 0.0
    %1266 = vmatprep.subr.mxu0 0.0
    %1267 = vmatpush1.msra.mxu0 0.0
    %1268 = vmatprep.subr.mxu0 0.0
    %1269 = vmatpush1.msra.mxu0 0.0
    %1270 = vmatprep.subr.mxu0 0.0
    %1271 = vmatpush1.msra.mxu0 0.0
    %1272 = vmatprep.subr.mxu0 0.0
    %1273 = vmatpush1.msra.mxu0 0.0
    %1274 = vmatprep.subr.mxu0 0.0
    %1275 = vmatpush1.msra.mxu0 0.0
    %1276 = vmatprep.subr.mxu0 0.0
    %1277 = vmatpush1.msra.mxu0 0.0
    %1278 = vmatprep.subr.mxu0 0.0
    %1279 = vmatpush1.msra.mxu0 0.0
    %1280 = vmatprep.subr.mxu0 0.0
    %1281 = vmatpush1.msra.mxu0 0.0
    %1282 = vmatprep.subr.mxu0 0.0
    %1283 = vmatpush1.msra.mxu0 0.0
    %1284 = vmatprep.subr.mxu0 0.0
    %1285 = vmatpush1.msra.mxu0 0.0
    %1286 = vmatprep.subr.mxu0 0.0
    %1287 = vmatpush1.msra.mxu0 0.0
    %1288 = vmatprep.subr.mxu0 0.0
    %1289 = vmatpush1.msra.mxu0 0.0
    %1290 = vmatprep.subr.mxu0 0.0
    %1291 = vmatpush1.msra.mxu0 0.0
    %1292 = vmatprep.subr.mxu0 0.0
    %1293 = vmatpush1.msra.mxu0 0.0
    %1294 = vmatprep.mubr.f32.mxu0 0.0
    %1295 = vmatmul.mubr.f32.gmra.mrb[0].mxu0 %v1204
    %v1296 = vpop.f32.mrb[0].mxu0
    %v1297 = vadd.f32 0.0, %v1296
    %v1298 = vpop.f32.mrb[0].mxu0
    %1299 = vmatprep.mubr.f32.mxu0 0.0
    %1300 = vmatmul.mubr.f32.gmra.mrb[0].mxu0 %v1207
    %v1301 = vpop.f32.mrb[0].mxu0
    %v1302 = vadd.f32 0.0, %v1301
    %v1303 = vpop.f32.mrb[0].mxu0
    %1304 = vmatprep.mubr.f32.mxu0 0.0
    %1305 = vmatmul.mubr.f32.gmra.mrb[0].mxu0 %v1210
    %v1306 = vpop.f32.mrb[0].mxu0
    %v1307 = vadd.f32 0.0, %v1306
    %v1308 = vpop.f32.mrb[0].mxu0
    %1309 = vmatprep.mubr.f32.mxu0 0.0
    %1310 = vmatmul.mubr.f32.gmra.mrb[0].mxu0 %v1213
    %v1311 = vpop.f32.mrb[0].mxu0
    %v1312 = vadd.f32 0.0, %v1311
    %v1313 = vpop.f32.mrb[0].mxu0
    %1314 = vmatprep.mubr.f32.mxu0 0.0
    %1315 = vmatmul.mubr.f32.gmra.mrb[0].mxu0 %v1216
    %v1316 = vpop.f32.mrb[0].mxu0
    %v1317 = vadd.f32 0.0, %v1316
    %v1318 = vpop.f32.mrb[0].mxu0
    %1319 = vmatprep.mubr.f32.mxu0 0.0
    %1320 = vmatmul.mubr.f32.gmra.mrb[0].mxu0 %v1219
    %v1321 = vpop.f32.mrb[0].mxu0
    %v1322 = vadd.f32 0.0, %v1321
    %v1323 = vpop.f32.mrb[0].mxu0
    %1324 = vmatprep.mubr.f32.mxu0 0.0
    %1325 = vmatmul.mubr.f32.gmra.mrb[0].mxu0 %v1222
    %v1326 = vpop.f32.mrb[0].mxu0
    %v1327 = vadd.f32 0.0, %v1326
    %v1328 = vpop.f32.mrb[0].mxu0
    %1329 = vmatprep.mubr.f32.mxu0 0.0
    %1330 = vmatmul.mubr.f32.gmra.mrb[0].mxu0 %v1225
    %v1331 = vpop.f32.mrb[0].mxu0
    %v1332 = vadd.f32 0.0, %v1331
    %v1333 = vpop.f32.mrb[0].mxu0
    %1334 = vdwg.mxu0
    %v1335 = vadd.f32 %v29, %v1297
    %v1336 = vadd.f32 %v30, %v1302
    %v1337 = vadd.f32 %v31, %v1307
    %v1338 = vadd.f32 %v32, %v1312
    %v1339 = vadd.f32 %v33, %v1317
    %v1340 = vadd.f32 %v34, %v1322
    %v1341 = vadd.f32 %v35, %v1327
    %v1342 = vadd.f32 %v36, %v1332
    %1343 = vst.msk [vmem:[%s7] sm:$0xff] %vm37, %v1335
    %1344 = vst.msk [vmem:[%s7 + $0x8] sm:$0xff] %vm37, %v1336
    %1345 = vst.msk [vmem:[%s7 + $0x10] sm:$0xff] %vm37, %v1337
    %1346 = vst.msk [vmem:[%s7 + $0x18] sm:$0xff] %vm37, %v1338
    %1347 = vst.msk [vmem:[%s7 + $0x20] sm:$0xff] %vm37, %v1339
    %1348 = vst.msk [vmem:[%s7 + $0x28] sm:$0xff] %vm37, %v1340
    %1349 = vst.msk [vmem:[%s7 + $0x30] sm:$0xff] %vm37, %v1341
    %1350 = vst.msk [vmem:[%s7 + $0x38] sm:$0xff] %vm37, %v1342
    %1351 = vst [vmem:[#allocation2] sm:$0xff] %v1025
    %1352 = vst [vmem:[#allocation2 + $0x8] sm:$0xff] %v1026
    %1353 = vst [vmem:[#allocation2 + $0x10] sm:$0xff] %v1027
    %1354 = vst [vmem:[#allocation2 + $0x18] sm:$0xff] %v1028
    %1355 = vst [vmem:[#allocation2 + $0x20] sm:$0xff] %v1029
    %1356 = vst [vmem:[#allocation2 + $0x28] sm:$0xff] %v1030
    %1357 = vst [vmem:[#allocation2 + $0x30] sm:$0xff] %v1031
    %1358 = vst [vmem:[#allocation2 + $0x38] sm:$0xff] %v1032
    // Predicated region
    $region30: #{tpu_custom_call.1} parent=1 // pred_check
      _
    $region31: #{tpu_custom_call.1} parent=1 // pred_check_branch
      %1360 = sbr.rel (0) target = $region33
    $region32: #{tpu_custom_call.1} parent=1 // pred_region
      _
    $region33: #{tpu_custom_call.1} parent=1 // pred_fallthru
      _
    // Predicated region
    $region34: #{tpu_custom_call.1} parent=1 // pred_check
      _
    $region35: #{tpu_custom_call.1} parent=1 // pred_check_branch
      %1362 = sbr.rel (0) target = $region37
    $region36: #{tpu_custom_call.1} parent=1 // pred_region
      %s1364 = ssub.s32 1024, 1024
      %1365 = vsyncadd [#allocation3], %s1364
      %s1366 = sshll.u32 [#allocation2], 4
      %s1367 = int_to_ptr.vmem [resolvable:$true] %s1366
      %1372 = dma.vmem_to_hbm [thread:$0]  %s1367, 1024, %s8, [#allocation3], 128, 128, 8
    $region37: #{tpu_custom_call.1} parent=1 // pred_fallthru
      _
    // Predicated region
    $region38: #{tpu_custom_call.1} parent=1 // pred_check
      _
    $region39: #{tpu_custom_call.1} parent=1 // pred_check_branch
      %1374 = sbr.rel (0) target = $region41
    $region40: #{tpu_custom_call.1} parent=1 // pred_region
      _
    $region41: #{tpu_custom_call.1} parent=1 // pred_fallthru
      _
    // Predicated region
    $region42: #{tpu_custom_call.1} parent=1 // pred_check
      _
    $region43: #{tpu_custom_call.1} parent=1 // pred_check_branch
      %1376 = sbr.rel (0) target = $region45
    $region44: #{tpu_custom_call.1} parent=1 // pred_region
      %1377 = dma.done [#allocation3], 1024
    $region45: #{tpu_custom_call.1} parent=1 // pred_fallthru
      _
    %1378 = vsyncpa [#allocation3], 1

</llo_original>
